<compile_context>
chip_gen: v7x
topology: tpu7x:2x2x1
jax: 0.10.0
libtpu: 0.0.40
codegen_flags: <defaults>
</compile_context>

<pallas_src>
import functools

import jax
import jax.numpy as jnp
from jax.experimental import pallas as pl
from jax.experimental.pallas import tpu as pltpu

OMEGA_0 = 30.0


def _round_up(x, m):
    return (x + m - 1) // m * m


def _blockdiag(a, b):
    """Block-diagonal of two [out, in] matrices -> [oa+ob, ia+ib]."""
    oa, ia = a.shape
    ob, ib = b.shape
    top = jnp.concatenate([a, jnp.zeros((oa, ib), a.dtype)], axis=1)
    bot = jnp.concatenate([jnp.zeros((ob, ia), b.dtype), b], axis=1)
    return jnp.concatenate([top, bot], axis=0)


# ----------------------------------------------------------------------------
# Kernel (transposed layout: activations are [channels, tm], N on lanes)
# ----------------------------------------------------------------------------
def head_kernel(
    x_ref,                                         # [2D, tm] stacked (feature ; latent)
    w0a_ref, b0a_ref, w0b_ref, b0b_ref,            # fused ResBlock (2D x 2D)
    w1_ref, b1_ref,                                # fused SineLayer (D x 2D)
    w2_ref, b2_ref,                                # fused SineLayer (D/2 x D)
    wf_ref, bf_ref,                                # final Linear (out x D/4)
    o_ref,                                         # [out, tm]
):
    D = x_ref.shape[0] // 2
    xin = x_ref[...].astype(jnp.float32)
    f = xin[:D, :]
    l = xin[D:, :]

    def fused_sine(x, w_ref, b_ref):
        # omega_0 is already folded into w and b.
        y = jnp.dot(w_ref[...], x, preferred_element_type=jnp.float32)
        return jnp.sin(y + b_ref[...])

    # ---- layer 0: ResBlock(D->D) on both branches (block-diag fused) ----
    x = jnp.concatenate([f * l, l], axis=0)        # (2D, tm)  [synthesis in | modulator in]
    s = fused_sine(x, w0a_ref, b0a_ref)
    s = fused_sine(s, w0b_ref, b0b_ref)
    x = 0.5 * (s + x)                              # residual for both branches at once
    f, l = x[:D, :], x[D:, :]

    # ---- layer 1: SineLayer(D -> D//2), both branches fused ----
    x = jnp.concatenate([f * l, l], axis=0)        # (2D, tm)
    x = fused_sine(x, w1_ref, b1_ref)              # (D, tm)
    h = D // 2
    f, l = x[:h, :], x[h:, :]

    # ---- layer 2: SineLayer(D//2 -> D//4), both branches fused ----
    x = jnp.concatenate([f * l, l], axis=0)        # (D, tm)
    x = fused_sine(x, w2_ref, b2_ref)              # (D//2, tm)
    q = D // 4
    f, l = x[:q, :], x[q:, :]

    # ---- final: Linear(D//4 -> out) + Tanh, lane-dense (out, tm) result ----
    y = jnp.dot(wf_ref[...], f * l, preferred_element_type=jnp.float32) + bf_ref[...]
    o_ref[...] = jnp.tanh(y)


# ----------------------------------------------------------------------------
# Weight preparation: [in,out] math weights -> fused [out,in] kernel weights.
# Call-invariant; do it ONCE (see make_head_forward), not per forward.
# ----------------------------------------------------------------------------
def _prepare_kernel_weights(p, omega=OMEGA_0):
    def sine_pair(ws, bs, wm, bm):
        # ws/wm stored [in,out]; kernel wants [out,in] with omega folded in.
        w = _blockdiag(omega * ws.T, omega * wm.T)
        b = omega * jnp.concatenate([bs, bm], axis=1).T        # (out_s+out_m, 1)
        return w, b

    w0a, b0a = sine_pair(p["ws0a"], p["bs0a"], p["wm0a"], p["bm0a"])
    w0b, b0b = sine_pair(p["ws0b"], p["bs0b"], p["wm0b"], p["bm0b"])
    w1, b1 = sine_pair(p["ws1"], p["bs1"], p["wm1"], p["bm1"])
    w2, b2 = sine_pair(p["ws2"], p["bs2"], p["wm2"], p["bm2"])
    wf = p["wf"].T                                             # (out, D//4), no omega
    bf = p["bf"].T                                             # (out, 1)
    return (w0a, b0a, w0b, b0b, w1, b1, w2, b2, wf, bf)


# ----------------------------------------------------------------------------
# Jitted forward implementation
# ----------------------------------------------------------------------------
@functools.partial(jax.jit, static_argnames=("tm", "stream_dtype"))
def _head_forward_impl(feature, latent, weights, *, tm, stream_dtype):
    N, D = feature.shape
    # D, D//2, D//4 must all be >=8 and 8-aligned so the sublane concats/slices
    # stay f32-tile-aligned (no relayout copies / sub-tile lowering failures).
    assert D % 32 == 0, "Head Pallas kernel requires feature_dims to be a multiple of 32"
    out_features = weights[-1].shape[0]

    if stream_dtype is not None:
        feature = feature.astype(stream_dtype)
        latent = latent.astype(stream_dtype)

    # ---- tile sizing -------------------------------------------------------
    tm = max(128, (int(tm) // 128) * 128)          # lane-width multiple
    n128 = _round_up(N, 128)
    tm = min(tm, n128)
    if n128 >= 256:
        # Ensure >=2 grid steps so the "parallel" axis shards across both
        # v7x TensorCores (largest tm that still yields >=2 steps).
        tm = min(tm, _round_up((n128 + 1) // 2, 128))
    n_pad = _round_up(N, tm)
    grid = (n_pad // tm,)
    pad = n_pad - N

    # ---- single stacked staging array: one pad+transpose, one DMA per step --
    x = jnp.concatenate([feature, latent], axis=1)             # (N, 2D)
    if pad:
        x = jnp.pad(x, ((0, pad), (0, 0)))
    x_t = x.T                                                  # (2D, n_pad)

    col_spec = pl.BlockSpec((2 * D, tm), lambda i: (0, i))
    out_spec = pl.BlockSpec((out_features, tm), lambda i: (0, i))

    def full_spec(a):
        return pl.BlockSpec(a.shape, lambda i: (0, 0))

    # Advisory cost estimate (per padded column). The kernel is
    # transcendental/VALU-bound at D=32 (~5.5*D + out sin/tanh per point).
    flops = n_pad * (16 * D * D + 4 * D * D + D * D + 2 * out_features * (D // 4))
    transcendentals = n_pad * (4 * D + D + D // 2 + out_features)
    bytes_accessed = (
        n_pad * 2 * D * x_t.dtype.itemsize
        + n_pad * out_features * 4
        + sum(int(w.size) * 4 for w in weights)
    )
    cost = pl.CostEstimate(
        flops=flops, transcendentals=transcendentals, bytes_accessed=bytes_accessed
    )

    out_t = pl.pallas_call(
        head_kernel,
        out_shape=jax.ShapeDtypeStruct((out_features, n_pad), jnp.float32),
        grid_spec=pltpu.PrefetchScalarGridSpec(
            num_scalar_prefetch=0,
            grid=grid,
            in_specs=[col_spec] + [full_spec(w) for w in weights],
            out_specs=out_spec,
        ),
        compiler_params=pltpu.CompilerParams(
            dimension_semantics=("parallel",),
            # Explicit budget: a few MiB live at tm=4096 (double-buffered
            # (2D, tm) input + intermediates); 48 MiB is safe on v5e/v6e/v7x.
            vmem_limit_bytes=48 * 1024 * 1024,
        ),
        cost_estimate=cost,
    )(x_t, *weights)

    return out_t[:, :N].T


def make_head_forward(params, *, tm=4096, stream_dtype=None):
    """Fuse the weights once and return a jitted forward(feature, latent)."""
    weights = _prepare_kernel_weights(params)

    def forward(feature, latent):
        return _head_forward_impl(feature, latent, weights, tm=tm, stream_dtype=stream_dtype)

    return forward


def head_forward(feature, latent, params, *, tm=4096, stream_dtype=None):
    """One-shot convenience wrapper (re-fuses weights each call).
    For repeated calls use make_head_forward()."""
    weights = _prepare_kernel_weights(params)
    return _head_forward_impl(feature, latent, weights, tm=tm, stream_dtype=stream_dtype)


# ----------------------------------------------------------------------------
# Parameter init (SIREN-style, matching the PyTorch module) + plain-JAX ref
# ----------------------------------------------------------------------------
def init_params(key, feature_dims, output_features=1):
    """Math weights stored [in, out]; biases stored [1, out]."""
    D = feature_dims

    def siren_w(key, fan_in, fan_out):
        bound = jnp.sqrt(6.0 / fan_in) / OMEGA_0
        return jax.random.uniform(key, (fan_in, fan_out), jnp.float32, -bound, bound)

    def linear_b(key, fan_in, fan_out):
        bound = 1.0 / jnp.sqrt(fan_in)
        return jax.random.uniform(key, (1, fan_out), jnp.float32, -bound, bound)

    keys = jax.random.split(key, 20)
    p = {}
    p["ws0a"], p["bs0a"] = siren_w(keys[0], D, D), linear_b(keys[1], D, D)
    p["ws0b"], p["bs0b"] = siren_w(keys[2], D, D), linear_b(keys[3], D, D)
    p["wm0a"], p["bm0a"] = siren_w(keys[4], D, D), linear_b(keys[5], D, D)
    p["wm0b"], p["bm0b"] = siren_w(keys[6], D, D), linear_b(keys[7], D, D)
    p["ws1"], p["bs1"] = siren_w(keys[8], D, D // 2), linear_b(keys[9], D, D // 2)
    p["wm1"], p["bm1"] = siren_w(keys[10], D, D // 2), linear_b(keys[11], D, D // 2)
    p["ws2"], p["bs2"] = siren_w(keys[12], D // 2, D // 4), linear_b(keys[13], D // 2, D // 4)
    p["wm2"], p["bm2"] = siren_w(keys[14], D // 2, D // 4), linear_b(keys[15], D // 2, D // 4)
    bound = 1.0 / jnp.sqrt(D // 4)
    p["wf"] = jax.random.uniform(keys[16], (D // 4, output_features), jnp.float32, -bound, bound)
    p["bf"] = jax.random.uniform(keys[17], (1, output_features), jnp.float32, -bound, bound)
    return p


def head_forward_ref(feature, latent, p):
    """Plain-JAX reference mirroring the PyTorch forward."""
    def sine(x, w, b):
        return jnp.sin(OMEGA_0 * (x @ w + b))

    f, l = feature, latent
    h = f * l
    s = sine(sine(h, p["ws0a"], p["bs0a"]), p["ws0b"], p["bs0b"])
    f = 0.5 * (s + h)
    m = sine(sine(l, p["wm0a"], p["bm0a"]), p["wm0b"], p["bm0b"])
    l = 0.5 * (m + l)
    f = sine(f * l, p["ws1"], p["bs1"])
    l = sine(l, p["wm1"], p["bm1"])
    f = sine(f * l, p["ws2"], p["bs2"])
    l = sine(l, p["wm2"], p["bm2"])
    return jnp.tanh((f * l) @ p["wf"] + p["bf"])


if __name__ == "__main__":
    feature_dims = 32      # D (must be a multiple of 32)
    output_features = 1
    N = 128                # number of points (rows)

    key = jax.random.PRNGKey(0)
    k_f, k_l, k_p = jax.random.split(key, 3)
    feature = jax.random.normal(k_f, (N, feature_dims), jnp.float32)
    latent = jax.random.normal(k_l, (N, feature_dims), jnp.float32)
    params = init_params(k_p, feature_dims, output_features)

    # Cached/jitted path: fuse weights once, reuse.
    forward = make_head_forward(params)

    out = jax.block_until_ready(forward(feature, latent))
    ref = head_forward_ref(feature, latent, params)
    assert out.shape == (N, output_features)
    assert jnp.allclose(out, ref, atol=1e-4, rtol=1e-4)

    # Non-multiple-of-tile path (padding + slice-off) with >=2 grid steps.
    N2 = 200
    f2 = jax.random.normal(jax.random.PRNGKey(1), (N2, feature_dims), jnp.float32)
    l2 = jax.random.normal(jax.random.PRNGKey(2), (N2, feature_dims), jnp.float32)
    out2 = jax.block_until_ready(forward(f2, l2))
    ref2 = head_forward_ref(f2, l2, params)
    assert out2.shape == (N2, output_features)
    assert jnp.allclose(out2, ref2, atol=1e-4, rtol=1e-4)

    # bf16 input-streaming path (v5e HBM saving); kernel upcasts to f32, so
    # only sanity-check shape/finiteness here (inputs themselves are rounded).
    out3 = jax.block_until_ready(
        head_forward(feature, latent, params, stream_dtype=jnp.bfloat16))
    assert out3.shape == (N, output_features)
    assert bool(jnp.all(jnp.isfinite(out3)))

    print("KERNEL_OK")
</pallas_src>

<mosaic_0001>
module attributes {stable_mosaic.version = 11 : i64} {
  func.func @head_kernel(%arg0: i32, %arg1: memref<64x128xf32, #tpu.memory_space<vmem>>, %arg2: memref<64x64xf32, #tpu.memory_space<vmem>>, %arg3: memref<64x1xf32, #tpu.memory_space<vmem>>, %arg4: memref<64x64xf32, #tpu.memory_space<vmem>>, %arg5: memref<64x1xf32, #tpu.memory_space<vmem>>, %arg6: memref<32x64xf32, #tpu.memory_space<vmem>>, %arg7: memref<32x1xf32, #tpu.memory_space<vmem>>, %arg8: memref<16x32xf32, #tpu.memory_space<vmem>>, %arg9: memref<16x1xf32, #tpu.memory_space<vmem>>, %arg10: memref<1x8xf32, #tpu.memory_space<vmem>>, %arg11: memref<1x1xf32, #tpu.memory_space<vmem>>, %arg12: memref<1x128xf32, #tpu.memory_space<vmem>>) attributes {dimension_semantics = [#tpu.dimension_semantics<parallel>], iteration_bounds = array<i64: 1>, scalar_prefetch = 0 : i64, scratch_operands = 0 : i64, tpu.core_type = #tpu.core_type<tc>, window_params = [{transform_indices = @transform_0, window_bounds = array<i64: 64, 128>}, {pipeline_mode = #tpu.pipeline_mode<synchronous>, transform_indices = @transform_1, window_bounds = array<i64: 64, 64>}, {pipeline_mode = #tpu.pipeline_mode<synchronous>, transform_indices = @transform_2, window_bounds = array<i64: 64, 1>}, {pipeline_mode = #tpu.pipeline_mode<synchronous>, transform_indices = @transform_3, window_bounds = array<i64: 64, 64>}, {pipeline_mode = #tpu.pipeline_mode<synchronous>, transform_indices = @transform_4, window_bounds = array<i64: 64, 1>}, {pipeline_mode = #tpu.pipeline_mode<synchronous>, transform_indices = @transform_5, window_bounds = array<i64: 32, 64>}, {pipeline_mode = #tpu.pipeline_mode<synchronous>, transform_indices = @transform_6, window_bounds = array<i64: 32, 1>}, {pipeline_mode = #tpu.pipeline_mode<synchronous>, transform_indices = @transform_7, window_bounds = array<i64: 16, 32>}, {pipeline_mode = #tpu.pipeline_mode<synchronous>, transform_indices = @transform_8, window_bounds = array<i64: 16, 1>}, {pipeline_mode = #tpu.pipeline_mode<synchronous>, transform_indices = @transform_9, window_bounds = array<i64: 1, 8>}, {pipeline_mode = #tpu.pipeline_mode<synchronous>, transform_indices = @transform_10, window_bounds = array<i64: 1, 1>}, {transform_indices = @transform_11, window_bounds = array<i64: 1, 128>}]} {
    %c0 = arith.constant 0 : index
    %c0_0 = arith.constant 0 : index
    %0 = vector.load %arg1[%c0, %c0_0] : memref<64x128xf32, #tpu.memory_space<vmem>>, vector<64x128xf32>
    %1 = vector.extract_strided_slice %0 {offsets = [0, 0], sizes = [32, 128], strides = [1, 1]} : vector<64x128xf32> to vector<32x128xf32>
    %2 = vector.extract_strided_slice %0 {offsets = [32, 0], sizes = [32, 128], strides = [1, 1]} : vector<64x128xf32> to vector<32x128xf32>
    %3 = arith.mulf %1, %2 : vector<32x128xf32>
    %4 = tpu.concatenate %3, %2 in 0 : vector<32x128xf32>, vector<32x128xf32> -> vector<64x128xf32>
    %c0_1 = arith.constant 0 : index
    %c0_2 = arith.constant 0 : index
    %5 = vector.load %arg2[%c0_1, %c0_2] : memref<64x64xf32, #tpu.memory_space<vmem>>, vector<64x64xf32>
    %cst = arith.constant dense<0.000000e+00> : vector<64x128xf32>
    %6 = tpu.matmul %5, %4, %cst {dimension_numbers = #tpu.dot_dimension_numbers<[1], [0], [0], [1], [0, 0, 1, 1], [], []>} : vector<64x64xf32>, vector<64x128xf32>, vector<64x128xf32> -> vector<64x128xf32>
    %c0_3 = arith.constant 0 : index
    %c0_4 = arith.constant 0 : index
    %7 = vector.load %arg3[%c0_3, %c0_4] : memref<64x1xf32, #tpu.memory_space<vmem>>, vector<64x1xf32>
    %8 = vector.broadcast %7 : vector<64x1xf32> to vector<64x128xf32>
    %9 = arith.addf %6, %8 : vector<64x128xf32>
    %10 = math.sin %9 : vector<64x128xf32>
    %c0_5 = arith.constant 0 : index
    %c0_6 = arith.constant 0 : index
    %11 = vector.load %arg4[%c0_5, %c0_6] : memref<64x64xf32, #tpu.memory_space<vmem>>, vector<64x64xf32>
    %cst_7 = arith.constant dense<0.000000e+00> : vector<64x128xf32>
    %12 = tpu.matmul %11, %10, %cst_7 {dimension_numbers = #tpu.dot_dimension_numbers<[1], [0], [0], [1], [0, 0, 1, 1], [], []>} : vector<64x64xf32>, vector<64x128xf32>, vector<64x128xf32> -> vector<64x128xf32>
    %c0_8 = arith.constant 0 : index
    %c0_9 = arith.constant 0 : index
    %13 = vector.load %arg5[%c0_8, %c0_9] : memref<64x1xf32, #tpu.memory_space<vmem>>, vector<64x1xf32>
    %14 = vector.broadcast %13 : vector<64x1xf32> to vector<64x128xf32>
    %15 = arith.addf %12, %14 : vector<64x128xf32>
    %16 = math.sin %15 : vector<64x128xf32>
    %17 = arith.addf %16, %4 : vector<64x128xf32>
    %cst_10 = arith.constant 5.000000e-01 : f32
    %18 = vector.broadcast %cst_10 : f32 to vector<64x128xf32>
    %19 = arith.mulf %18, %17 : vector<64x128xf32>
    %20 = vector.extract_strided_slice %19 {offsets = [0, 0], sizes = [32, 128], strides = [1, 1]} : vector<64x128xf32> to vector<32x128xf32>
    %21 = vector.extract_strided_slice %19 {offsets = [32, 0], sizes = [32, 128], strides = [1, 1]} : vector<64x128xf32> to vector<32x128xf32>
    %22 = arith.mulf %20, %21 : vector<32x128xf32>
    %23 = tpu.concatenate %22, %21 in 0 : vector<32x128xf32>, vector<32x128xf32> -> vector<64x128xf32>
    %c0_11 = arith.constant 0 : index
    %c0_12 = arith.constant 0 : index
    %24 = vector.load %arg6[%c0_11, %c0_12] : memref<32x64xf32, #tpu.memory_space<vmem>>, vector<32x64xf32>
    %cst_13 = arith.constant dense<0.000000e+00> : vector<32x128xf32>
    %25 = tpu.matmul %24, %23, %cst_13 {dimension_numbers = #tpu.dot_dimension_numbers<[1], [0], [0], [1], [0, 0, 1, 1], [], []>} : vector<32x64xf32>, vector<64x128xf32>, vector<32x128xf32> -> vector<32x128xf32>
    %c0_14 = arith.constant 0 : index
    %c0_15 = arith.constant 0 : index
    %26 = vector.load %arg7[%c0_14, %c0_15] : memref<32x1xf32, #tpu.memory_space<vmem>>, vector<32x1xf32>
    %27 = vector.broadcast %26 : vector<32x1xf32> to vector<32x128xf32>
    %28 = arith.addf %25, %27 : vector<32x128xf32>
    %29 = math.sin %28 : vector<32x128xf32>
    %30 = vector.extract_strided_slice %29 {offsets = [0, 0], sizes = [16, 128], strides = [1, 1]} : vector<32x128xf32> to vector<16x128xf32>
    %31 = vector.extract_strided_slice %29 {offsets = [16, 0], sizes = [16, 128], strides = [1, 1]} : vector<32x128xf32> to vector<16x128xf32>
    %32 = arith.mulf %30, %31 : vector<16x128xf32>
    %33 = tpu.concatenate %32, %31 in 0 : vector<16x128xf32>, vector<16x128xf32> -> vector<32x128xf32>
    %c0_16 = arith.constant 0 : index
    %c0_17 = arith.constant 0 : index
    %34 = vector.load %arg8[%c0_16, %c0_17] : memref<16x32xf32, #tpu.memory_space<vmem>>, vector<16x32xf32>
    %cst_18 = arith.constant dense<0.000000e+00> : vector<16x128xf32>
    %35 = tpu.matmul %34, %33, %cst_18 {dimension_numbers = #tpu.dot_dimension_numbers<[1], [0], [0], [1], [0, 0, 1, 1], [], []>} : vector<16x32xf32>, vector<32x128xf32>, vector<16x128xf32> -> vector<16x128xf32>
    %c0_19 = arith.constant 0 : index
    %c0_20 = arith.constant 0 : index
    %36 = vector.load %arg9[%c0_19, %c0_20] : memref<16x1xf32, #tpu.memory_space<vmem>>, vector<16x1xf32>
    %37 = vector.broadcast %36 : vector<16x1xf32> to vector<16x128xf32>
    %38 = arith.addf %35, %37 : vector<16x128xf32>
    %39 = math.sin %38 : vector<16x128xf32>
    %40 = vector.extract_strided_slice %39 {offsets = [0, 0], sizes = [8, 128], strides = [1, 1]} : vector<16x128xf32> to vector<8x128xf32>
    %41 = vector.extract_strided_slice %39 {offsets = [8, 0], sizes = [8, 128], strides = [1, 1]} : vector<16x128xf32> to vector<8x128xf32>
    %c0_21 = arith.constant 0 : index
    %c0_22 = arith.constant 0 : index
    %42 = vector.load %arg10[%c0_21, %c0_22] : memref<1x8xf32, #tpu.memory_space<vmem>>, vector<1x8xf32>
    %43 = arith.mulf %40, %41 : vector<8x128xf32>
    %cst_23 = arith.constant dense<0.000000e+00> : vector<1x128xf32>
    %44 = tpu.matmul %42, %43, %cst_23 {dimension_numbers = #tpu.dot_dimension_numbers<[1], [0], [0], [1], [0, 0, 1, 1], [], []>} : vector<1x8xf32>, vector<8x128xf32>, vector<1x128xf32> -> vector<1x128xf32>
    %c0_24 = arith.constant 0 : index
    %c0_25 = arith.constant 0 : index
    %45 = vector.load %arg11[%c0_24, %c0_25] : memref<1x1xf32, #tpu.memory_space<vmem>>, vector<1x1xf32>
    %46 = vector.broadcast %45 : vector<1x1xf32> to vector<1x128xf32>
    %47 = arith.addf %44, %46 : vector<1x128xf32>
    %48 = math.tanh %47 : vector<1x128xf32>
    %c0_26 = arith.constant 0 : index
    %c0_27 = arith.constant 0 : index
    %49 = vector.load %arg12[%c0_26, %c0_27] : memref<1x128xf32, #tpu.memory_space<vmem>>, vector<1x128xf32>
    tpu.vector_store %arg12[%c0_26, %c0_27], %48 {strides = array<i32>} : memref<1x128xf32, #tpu.memory_space<vmem>>, vector<1x128xf32>,
    return
  }
  func.func @transform_0(%arg0: i32) -> (i32, i32) {
    %c0_i32 = arith.constant 0 : i32
    %c0_i32_0 = arith.constant 0 : i32
    return %c0_i32, %arg0 : i32, i32
  }
  func.func @transform_1(%arg0: i32) -> (i32, i32) {
    %c0_i32 = arith.constant 0 : i32
    %c0_i32_0 = arith.constant 0 : i32
    %c0_i32_1 = arith.constant 0 : i32
    return %c0_i32, %c0_i32_0 : i32, i32
  }
  func.func @transform_2(%arg0: i32) -> (i32, i32) {
    %c0_i32 = arith.constant 0 : i32
    %c0_i32_0 = arith.constant 0 : i32
    %c0_i32_1 = arith.constant 0 : i32
    return %c0_i32, %c0_i32_0 : i32, i32
  }
  func.func @transform_3(%arg0: i32) -> (i32, i32) {
    %c0_i32 = arith.constant 0 : i32
    %c0_i32_0 = arith.constant 0 : i32
    %c0_i32_1 = arith.constant 0 : i32
    return %c0_i32, %c0_i32_0 : i32, i32
  }
  func.func @transform_4(%arg0: i32) -> (i32, i32) {
    %c0_i32 = arith.constant 0 : i32
    %c0_i32_0 = arith.constant 0 : i32
    %c0_i32_1 = arith.constant 0 : i32
    return %c0_i32, %c0_i32_0 : i32, i32
  }
  func.func @transform_5(%arg0: i32) -> (i32, i32) {
    %c0_i32 = arith.constant 0 : i32
    %c0_i32_0 = arith.constant 0 : i32
    %c0_i32_1 = arith.constant 0 : i32
    return %c0_i32, %c0_i32_0 : i32, i32
  }
  func.func @transform_6(%arg0: i32) -> (i32, i32) {
    %c0_i32 = arith.constant 0 : i32
    %c0_i32_0 = arith.constant 0 : i32
    %c0_i32_1 = arith.constant 0 : i32
    return %c0_i32, %c0_i32_0 : i32, i32
  }
  func.func @transform_7(%arg0: i32) -> (i32, i32) {
    %c0_i32 = arith.constant 0 : i32
    %c0_i32_0 = arith.constant 0 : i32
    %c0_i32_1 = arith.constant 0 : i32
    return %c0_i32, %c0_i32_0 : i32, i32
  }
  func.func @transform_8(%arg0: i32) -> (i32, i32) {
    %c0_i32 = arith.constant 0 : i32
    %c0_i32_0 = arith.constant 0 : i32
    %c0_i32_1 = arith.constant 0 : i32
    return %c0_i32, %c0_i32_0 : i32, i32
  }
  func.func @transform_9(%arg0: i32) -> (i32, i32) {
    %c0_i32 = arith.constant 0 : i32
    %c0_i32_0 = arith.constant 0 : i32
    %c0_i32_1 = arith.constant 0 : i32
    return %c0_i32, %c0_i32_0 : i32, i32
  }
  func.func @transform_10(%arg0: i32) -> (i32, i32) {
    %c0_i32 = arith.constant 0 : i32
    %c0_i32_0 = arith.constant 0 : i32
    %c0_i32_1 = arith.constant 0 : i32
    return %c0_i32, %c0_i32_0 : i32, i32
  }
  func.func @transform_11(%arg0: i32) -> (i32, i32) {
    %c0_i32 = arith.constant 0 : i32
    %c0_i32_0 = arith.constant 0 : i32
    return %c0_i32, %arg0 : i32, i32
  }
}

</mosaic_0001>

<llo_original>
// kernel: _head_forward_impl.1
$region0: #{_head_forward_impl.1}
  #allocation0 [shape = 'u32[]', space=smem, size = 0x4, offset = 0x4, fixed_abs, tag = 'smem constant byte address 0x4 - core index']
  #allocation1 [shape = 'u32[144,128]{1,0:T(1,128)}', space=vmem, size = 0x12000, scoped, tag = 'internal scratch']
  #allocation2 [shape = 'f32[1,1]{1,0:T(1,128)S(1)}', space=vmem, size = 0x200, scoped, tag = 'scoped memory for _head_forward_impl.1']
  %s0 = inlined_call_operand.vmem [shape: f32[64,128], index: 0, kind: input, shape index: {}]
  %s1 = inlined_call_operand.vmem [shape: f32[64,64], index: 1, kind: input, shape index: {}]
  %s2 = inlined_call_operand.vmem [shape: f32[64,1], index: 2, kind: input, shape index: {}]
  %s3 = inlined_call_operand.vmem [shape: f32[64,64], index: 3, kind: input, shape index: {}]
  %s4 = inlined_call_operand.vmem [shape: f32[64,1], index: 4, kind: input, shape index: {}]
  %s5 = inlined_call_operand.vmem [shape: f32[32,64], index: 5, kind: input, shape index: {}]
  %s6 = inlined_call_operand.vmem [shape: f32[32,1], index: 6, kind: input, shape index: {}]
  %s7 = inlined_call_operand.vmem [shape: f32[16,32], index: 7, kind: input, shape index: {}]
  %s8 = inlined_call_operand.vmem [shape: f32[16,1], index: 8, kind: input, shape index: {}]
  %s9 = inlined_call_operand.vmem [shape: f32[1,8], index: 9, kind: input, shape index: {}]
  %s10 = inlined_call_operand.<no memory space> [shape: f32[1,1], index: 10, kind: input, shape index: {}]
  %s11 = inlined_call_operand.hbm [shape: f32[1,128], index: 11, kind: output, shape index: {}]
  %s12 = sld [smem:[#allocation0]]
  $region54: #{_head_forward_impl.1} parent=0
    _
  %s14 = ssub.s32 1, %s12
  %s15 = scalar_select 0, %s14, %s12
  %v16 = vstv %s10
  %17 = vst [vmem:[#allocation2] sm:$0x1] %v16
  $region1: #{_head_forward_impl.1} parent=0
    #allocation3 [shape = 'u8[512]{0}', space=vmem, size = 0x400, scoped, tag = 'output window, operand 0, single buffered']
    #allocation4 [shape = 's32[1]{0}', space=sflag, size = 0x4, scoped, tag = 'scoped memory for _head_forward_impl.1']
    %18 = vsyncpa [#allocation4], 0
    // Predicated region
    $region2: #{_head_forward_impl.1} parent=1 // pred_check
      _
    $region3: #{_head_forward_impl.1} parent=1 // pred_check_branch
      %20 = sbr.rel (0) target = $region5
    $region4: #{_head_forward_impl.1} parent=1 // pred_region
      _
    $region5: #{_head_forward_impl.1} parent=1 // pred_fallthru
      _
    // Predicated region
    $region6: #{_head_forward_impl.1} parent=1 // pred_check
      _
    $region7: #{_head_forward_impl.1} parent=1 // pred_check_branch
      %22 = sbr.rel (0) target = $region9
    $region8: #{_head_forward_impl.1} parent=1 // pred_region
      _
    $region9: #{_head_forward_impl.1} parent=1 // pred_fallthru
      _
    // Predicated region
    $region10: #{_head_forward_impl.1} parent=1 // pred_check
      _
    $region11: #{_head_forward_impl.1} parent=1 // pred_check_branch
      %24 = sbr.rel (0) target = $region13
    $region12: #{_head_forward_impl.1} parent=1 // pred_region
      _
    $region13: #{_head_forward_impl.1} parent=1 // pred_fallthru
      _
    // Predicated region
    $region14: #{_head_forward_impl.1} parent=1 // pred_check
      _
    $region15: #{_head_forward_impl.1} parent=1 // pred_check_branch
      %26 = sbr.rel (0) target = $region17
    $region16: #{_head_forward_impl.1} parent=1 // pred_region
      _
    $region17: #{_head_forward_impl.1} parent=1 // pred_fallthru
      _
    // Predicated region
    $region18: #{_head_forward_impl.1} parent=1 // pred_check
      _
    $region19: #{_head_forward_impl.1} parent=1 // pred_check_branch
      %28 = sbr.rel (0) target = $region21
    $region20: #{_head_forward_impl.1} parent=1 // pred_region
      _
    $region21: #{_head_forward_impl.1} parent=1 // pred_fallthru
      _
    // Predicated region
    $region22: #{_head_forward_impl.1} parent=1 // pred_check
      _
    $region23: #{_head_forward_impl.1} parent=1 // pred_check_branch
      %30 = sbr.rel (0) target = $region25
    $region24: #{_head_forward_impl.1} parent=1 // pred_region
      _
    $region25: #{_head_forward_impl.1} parent=1 // pred_fallthru
      _
    // Predicated region
    $region26: #{_head_forward_impl.1} parent=1 // pred_check
      _
    $region27: #{_head_forward_impl.1} parent=1 // pred_check_branch
      %32 = sbr.rel (0) target = $region29
    $region28: #{_head_forward_impl.1} parent=1 // pred_region
      _
    $region29: #{_head_forward_impl.1} parent=1 // pred_fallthru
      _
    // Predicated region
    $region30: #{_head_forward_impl.1} parent=1 // pred_check
      _
    $region31: #{_head_forward_impl.1} parent=1 // pred_check_branch
      %34 = sbr.rel (0) target = $region33
    $region32: #{_head_forward_impl.1} parent=1 // pred_region
      _
    $region33: #{_head_forward_impl.1} parent=1 // pred_fallthru
      _
    // Predicated region
    $region34: #{_head_forward_impl.1} parent=1 // pred_check
      _
    $region35: #{_head_forward_impl.1} parent=1 // pred_check_branch
      %36 = sbr.rel (0) target = $region37
    $region36: #{_head_forward_impl.1} parent=1 // pred_region
      _
    $region37: #{_head_forward_impl.1} parent=1 // pred_fallthru
      _
    // Predicated region
    $region38: #{_head_forward_impl.1} parent=1 // pred_check
      _
    $region39: #{_head_forward_impl.1} parent=1 // pred_check_branch
      %38 = sbr.rel (0) target = $region41
    $region40: #{_head_forward_impl.1} parent=1 // pred_region
      _
    $region41: #{_head_forward_impl.1} parent=1 // pred_fallthru
      _
    // Predicated region
    $region42: #{_head_forward_impl.1} parent=1 // pred_check
      _
    $region43: #{_head_forward_impl.1} parent=1 // pred_check_branch
      %40 = sbr.rel (0) target = $region45
    $region44: #{_head_forward_impl.1} parent=1 // pred_region
      _
    $region45: #{_head_forward_impl.1} parent=1 // pred_fallthru
      _
    %v41 = vld [vmem:[%s0] sm:$0xff]
    %v42 = vld [vmem:[%s0 + $0x8] sm:$0xff]
    %v43 = vld [vmem:[%s0 + $0x10] sm:$0xff]
    %v44 = vld [vmem:[%s0 + $0x18] sm:$0xff]
    %v45 = vld [vmem:[%s0 + $0x20] sm:$0xff]
    %v46 = vld [vmem:[%s0 + $0x28] sm:$0xff]
    %v47 = vld [vmem:[%s0 + $0x30] sm:$0xff]
    %v48 = vld [vmem:[%s0 + $0x38] sm:$0xff]
    %v49 = vmul.f32 %v41, %v45
    %v50 = vmul.f32 %v42, %v46
    %v51 = vmul.f32 %v43, %v47
    %v52 = vmul.f32 %v44, %v48
    %v53 = vld [vmem:[%s1] sm:$0xff]
    %v54 = vld [vmem:[%s1 + $0x8] sm:$0xff]
    %v55 = vld [vmem:[%s1 + $0x10] sm:$0xff]
    %v56 = vld [vmem:[%s1 + $0x18] sm:$0xff]
    %v57 = vld [vmem:[%s1 + $0x20] sm:$0xff]
    %v58 = vld [vmem:[%s1 + $0x28] sm:$0xff]
    %v59 = vld [vmem:[%s1 + $0x30] sm:$0xff]
    %v60 = vld [vmem:[%s1 + $0x38] sm:$0xff]
    %v61 = vld [vmem:[%s2] sm:$0xff]
    %v62 = vld [vmem:[%s2 + $0x8] sm:$0xff]
    %v63 = vld [vmem:[%s2 + $0x10] sm:$0xff]
    %v64 = vld [vmem:[%s2 + $0x18] sm:$0xff]
    %v65 = vld [vmem:[%s2 + $0x20] sm:$0xff]
    %v66 = vld [vmem:[%s2 + $0x28] sm:$0xff]
    %v67 = vld [vmem:[%s2 + $0x30] sm:$0xff]
    %v68 = vld [vmem:[%s2 + $0x38] sm:$0xff]
    %70 = vset.pattern.permute.xlu0 0
    %71 = vperm.xlu0 %70, %v61
    %v72 = vpop.permute.xlu0 %71
    %75 = vset.pattern.permute.xlu0 0
    %76 = vperm.xlu0 %75, %v62
    %v77 = vpop.permute.xlu0 %76
    %80 = vset.pattern.permute.xlu0 0
    %81 = vperm.xlu0 %80, %v63
    %v82 = vpop.permute.xlu0 %81
    %85 = vset.pattern.permute.xlu0 0
    %86 = vperm.xlu0 %85, %v64
    %v87 = vpop.permute.xlu0 %86
    %90 = vset.pattern.permute.xlu0 0
    %91 = vperm.xlu0 %90, %v65
    %v92 = vpop.permute.xlu0 %91
    %95 = vset.pattern.permute.xlu0 0
    %96 = vperm.xlu0 %95, %v66
    %v97 = vpop.permute.xlu0 %96
    %100 = vset.pattern.permute.xlu0 0
    %101 = vperm.xlu0 %100, %v67
    %v102 = vpop.permute.xlu0 %101
    %105 = vset.pattern.permute.xlu0 0
    %106 = vperm.xlu0 %105, %v68
    %v107 = vpop.permute.xlu0 %106
    %vm109 = vcmask 523264
    %v111 = vsel %vm109, %v53, 0
    %v114 = vsel %vm109, %v54, 0
    %v117 = vsel %vm109, %v55, 0
    %v120 = vsel %vm109, %v56, 0
    %v123 = vsel %vm109, %v57, 0
    %v126 = vsel %vm109, %v58, 0
    %v129 = vsel %vm109, %v59, 0
    %v132 = vsel %vm109, %v60, 0
    %134 = vmatprep.subr.mxu0 0.0
    %135 = vmatpush1.msra.mxu0 %v49
    %136 = vmatprep.subr.mxu0 0.0
    %137 = vmatpush1.msra.mxu0 %v50
    %138 = vmatprep.subr.mxu0 0.0
    %139 = vmatpush1.msra.mxu0 %v51
    %140 = vmatprep.subr.mxu0 0.0
    %141 = vmatpush1.msra.mxu0 %v52
    %142 = vmatprep.subr.mxu0 0.0
    %143 = vmatpush1.msra.mxu0 %v45
    %144 = vmatprep.subr.mxu0 0.0
    %145 = vmatpush1.msra.mxu0 %v46
    %146 = vmatprep.subr.mxu0 0.0
    %147 = vmatpush1.msra.mxu0 %v47
    %148 = vmatprep.subr.mxu0 0.0
    %149 = vmatpush1.msra.mxu0 %v48
    %150 = vmatprep.subr.mxu0 0.0
    %151 = vmatpush1.msra.mxu0 0.0
    %152 = vmatprep.subr.mxu0 0.0
    %153 = vmatpush1.msra.mxu0 0.0
    %154 = vmatprep.subr.mxu0 0.0
    %155 = vmatpush1.msra.mxu0 0.0
    %156 = vmatprep.subr.mxu0 0.0
    %157 = vmatpush1.msra.mxu0 0.0
    %158 = vmatprep.subr.mxu0 0.0
    %159 = vmatpush1.msra.mxu0 0.0
    %160 = vmatprep.subr.mxu0 0.0
    %161 = vmatpush1.msra.mxu0 0.0
    %162 = vmatprep.subr.mxu0 0.0
    %163 = vmatpush1.msra.mxu0 0.0
    %164 = vmatprep.subr.mxu0 0.0
    %165 = vmatpush1.msra.mxu0 0.0
    %166 = vmatprep.subr.mxu0 0.0
    %167 = vmatpush1.msra.mxu0 0.0
    %168 = vmatprep.subr.mxu0 0.0
    %169 = vmatpush1.msra.mxu0 0.0
    %170 = vmatprep.subr.mxu0 0.0
    %171 = vmatpush1.msra.mxu0 0.0
    %172 = vmatprep.subr.mxu0 0.0
    %173 = vmatpush1.msra.mxu0 0.0
    %174 = vmatprep.subr.mxu0 0.0
    %175 = vmatpush1.msra.mxu0 0.0
    %176 = vmatprep.subr.mxu0 0.0
    %177 = vmatpush1.msra.mxu0 0.0
    %178 = vmatprep.subr.mxu0 0.0
    %179 = vmatpush1.msra.mxu0 0.0
    %180 = vmatprep.subr.mxu0 0.0
    %181 = vmatpush1.msra.mxu0 0.0
    %182 = vmatprep.subr.mxu0 0.0
    %183 = vmatpush1.msra.mxu0 0.0
    %184 = vmatprep.subr.mxu0 0.0
    %185 = vmatpush1.msra.mxu0 0.0
    %186 = vmatprep.subr.mxu0 0.0
    %187 = vmatpush1.msra.mxu0 0.0
    %188 = vmatprep.subr.mxu0 0.0
    %189 = vmatpush1.msra.mxu0 0.0
    %190 = vmatprep.subr.mxu0 0.0
    %191 = vmatpush1.msra.mxu0 0.0
    %192 = vmatprep.subr.mxu0 0.0
    %193 = vmatpush1.msra.mxu0 0.0
    %194 = vmatprep.subr.mxu0 0.0
    %195 = vmatpush1.msra.mxu0 0.0
    %196 = vmatprep.subr.mxu0 0.0
    %197 = vmatpush1.msra.mxu0 0.0
    %198 = vmatprep.mubr.f32.mxu0 0.0
    %199 = vmatmul.mubr.f32.gmra.mrb[0].mxu0 %v111
    %v200 = vpop.f32.mrb[0].mxu0
    %v201 = vadd.f32 %v72, %v200
    %v202 = vpop.f32.mrb[0].mxu0
    %203 = vmatprep.mubr.f32.mxu0 0.0
    %204 = vmatmul.mubr.f32.gmra.mrb[0].mxu0 %v114
    %v205 = vpop.f32.mrb[0].mxu0
    %v206 = vadd.f32 %v77, %v205
    %v207 = vpop.f32.mrb[0].mxu0
    %208 = vmatprep.mubr.f32.mxu0 0.0
    %209 = vmatmul.mubr.f32.gmra.mrb[0].mxu0 %v117
    %v210 = vpop.f32.mrb[0].mxu0
    %v211 = vadd.f32 %v82, %v210
    %v212 = vpop.f32.mrb[0].mxu0
    %213 = vmatprep.mubr.f32.mxu0 0.0
    %214 = vmatmul.mubr.f32.gmra.mrb[0].mxu0 %v120
    %v215 = vpop.f32.mrb[0].mxu0
    %v216 = vadd.f32 %v87, %v215
    %v217 = vpop.f32.mrb[0].mxu0
    %218 = vmatprep.mubr.f32.mxu0 0.0
    %219 = vmatmul.mubr.f32.gmra.mrb[0].mxu0 %v123
    %v220 = vpop.f32.mrb[0].mxu0
    %v221 = vadd.f32 %v92, %v220
    %v222 = vpop.f32.mrb[0].mxu0
    %223 = vmatprep.mubr.f32.mxu0 0.0
    %224 = vmatmul.mubr.f32.gmra.mrb[0].mxu0 %v126
    %v225 = vpop.f32.mrb[0].mxu0
    %v226 = vadd.f32 %v97, %v225
    %v227 = vpop.f32.mrb[0].mxu0
    %228 = vmatprep.mubr.f32.mxu0 0.0
    %229 = vmatmul.mubr.f32.gmra.mrb[0].mxu0 %v129
    %v230 = vpop.f32.mrb[0].mxu0
    %v231 = vadd.f32 %v102, %v230
    %v232 = vpop.f32.mrb[0].mxu0
    %233 = vmatprep.mubr.f32.mxu0 0.0
    %234 = vmatmul.mubr.f32.gmra.mrb[0].mxu0 %v132
    %v235 = vpop.f32.mrb[0].mxu0
    %v236 = vadd.f32 %v107, %v235
    %v237 = vpop.f32.mrb[0].mxu0
    %238 = vdwg.mxu0
    %v239 = vand.u32 2147483647, %v201
    %vm240 = vcmp.le.f32.partialorder %v239, 0.7853982
    %vm241 = vcmp.lt.s32.totalorder %v201, 0
    %v242 = vand.u32 %v201, 2139095040
    %v243 = vshrl.u32 %v242, 23
    %v244 = vsub.s32 %v243, 127
    %v245 = vand.u32 2147483647, %v201
    %v246 = vand.u32 %v245, 8388607
    %v247 = vor.u32 %v246, 8388608
    %v248 = vsub.s32 0, %v247
    %v249 = vadd.s32 %v244, 1
    %vm250 = vcmp.gt.s32.totalorder %v249, 0
    %v251 = vsel %vm250, %v249, 0
    %v252 = vshrl.u32 %v251, 5
    %v253 = vand.u32 %v251, 31
    %v254 = vsub.s32 32, %v253
    %v255 = vshrl.u32 683565275, %v254
    %v256 = vshll.u32 683565275, %v253
    %v257 = vshrl.u32 2475754826, %v254
    %v258 = vor.u32 %v256, %v257
    %v259 = vshll.u32 2475754826, %v253
    %v260 = vshrl.u32 2131351028, %v254
    %v261 = vor.u32 %v259, %v260
    %v262 = vshll.u32 2131351028, %v253
    %v263 = vshrl.u32 2102212464, %v254
    %v264 = vor.u32 %v262, %v263
    %v265 = vshll.u32 2102212464, %v253
    %v266 = vshrl.u32 920167782, %v254
    %v267 = vor.u32 %v265, %v266
    %v268 = vshll.u32 920167782, %v253
    %v269 = vshrl.u32 1326507024, %v254
    %v270 = vor.u32 %v268, %v269
    %vm271 = vcmp.lt.s32.totalorder %v252, 1
    %vm272 = vcmp.lt.s32.totalorder %v252, 2
    %vm273 = vcmp.lt.s32.totalorder %v252, 3
    %vm274 = vcmp.lt.s32.totalorder %v252, 4
    %v275 = vsel %vm271, %v255, %v258
    %v276 = vsel %vm274, %v264, 2102212464
    %v277 = vsel %vm273, %v261, %v276
    %v278 = vsel %vm272, %v275, %v277
    %v279 = vsel %vm271, %v258, %v261
    %v280 = vsel %vm274, %v267, 920167782
    %v281 = vsel %vm273, %v264, %v280
    %v282 = vsel %vm272, %v279, %v281
    %v283 = vsel %vm271, %v261, %v264
    %v284 = vsel %vm274, %v270, 1326507024
    %v285 = vsel %vm273, %v267, %v284
    %v286 = vsel %vm272, %v283, %v285
    %v287 = vshll.u32 %v247, 8
    %v288 = vmul.u32.u64.compose %v287, %v286
    %v289 = vextract.low.u32 %v288
    %v290 = vextract.high.u32 %v288
    %v291 = vmul.u32.u64.compose %v287, %v282
    %v292 = vextract.low.u32 %v291
    %v293 = vextract.high.u32 %v291
    %v294 = vmul.u32 %v287, %v278
    %v295 = vadd.s32 %v290, %v292
    %vm296 = vc.u32 %v290, %v292
    %v297 = vadd.s32 %v293, 1
    %v298 = vsel %vm296, %v297, %v293
    %v299 = vadd.s32 %v294, %v298
    %v300 = vadd.s32 %v299, 536870912
    %v301 = vshrl.u32 %v300, 30
    %v302 = vshll.u32 %v301, 30
    %v303 = vsub.s32 %v299, %v302
    %vm304 = vcmp.lt.s32.totalorder %v303, 0
    %v305 = vsub.s32 0, %v303
    %v306 = vsel %vm304, %v305, %v303
    %v307 = vclz %v306
    %v308 = vsub.s32 %v307, 2
    %vm309 = vcmp.gt.s32.totalorder 0, %v308
    %v310 = vsel %vm309, 0, %v308
    %v311 = vsub.s32 32, %v310
    %v312 = vshll.u32 %v303, %v310
    %v313 = vshrl.u32 %v295, %v311
    %v314 = vor.u32 %v312, %v313
    %v315 = vsub.s32 4294967266, %v310
    %v316 = vadd.s32 %v315, 127
    %v317 = vshll.u32 %v316, 23
    %v318 = vor.u32 4788187, %v317
    %v319 = vand.u32 2147483647, %v318
    %v321 = vcvt.s32.f32 %v314
    %v322 = vmul.f32 %v321, %v319
    %v323 = vxor.u32 %v322, 2147483648
    %v324 = vsel %vm241, %v323, %v322
    %v325 = vsub.s32 4, %v301
    %v326 = vsel %vm241, %v325, %v301
    %v327 = vsel %vm240, %v201, %v324
    %v328 = vsel %vm240, 0, %v326
    %v329 = vcosq.f32.pop %v327
    %v330 = vsinq.f32.pop %v327
    %vm331 = vweird.f32 %v201
    %v332 = vadd.s32 %v328, 3
    %v333 = vand.u32 %v332, 3
    %vm334 = vcmp.lt.s32.totalorder %v333, 2
    %vm335 = vcmp.eq.s32.totalorder %v333, 0
    %v336 = vxor.u32 %v330, 2147483648
    %v337 = vsel %vm335, %v329, %v336
    %vm338 = vcmp.eq.s32.totalorder %v333, 2
    %v339 = vxor.u32 %v329, 2147483648
    %v340 = vsel %vm338, %v339, %v330
    %v341 = vsel %vm334, %v337, %v340
    %v342 = vsel %vm331, nan, %v341
    %v343 = vand.u32 2147483647, %v206
    %vm344 = vcmp.le.f32.partialorder %v343, 0.7853982
    %vm345 = vcmp.lt.s32.totalorder %v206, 0
    %v346 = vand.u32 %v206, 2139095040
    %v347 = vshrl.u32 %v346, 23
    %v348 = vsub.s32 %v347, 127
    %v349 = vand.u32 2147483647, %v206
    %v350 = vand.u32 %v349, 8388607
    %v351 = vor.u32 %v350, 8388608
    %v352 = vsub.s32 0, %v351
    %v353 = vadd.s32 %v348, 1
    %vm354 = vcmp.gt.s32.totalorder %v353, 0
    %v355 = vsel %vm354, %v353, 0
    %v356 = vshrl.u32 %v355, 5
    %v357 = vand.u32 %v355, 31
    %v358 = vsub.s32 32, %v357
    %v359 = vshrl.u32 683565275, %v358
    %v360 = vshll.u32 683565275, %v357
    %v361 = vshrl.u32 2475754826, %v358
    %v362 = vor.u32 %v360, %v361
    %v363 = vshll.u32 2475754826, %v357
    %v364 = vshrl.u32 2131351028, %v358
    %v365 = vor.u32 %v363, %v364
    %v366 = vshll.u32 2131351028, %v357
    %v367 = vshrl.u32 2102212464, %v358
    %v368 = vor.u32 %v366, %v367
    %v369 = vshll.u32 2102212464, %v357
    %v370 = vshrl.u32 920167782, %v358
    %v371 = vor.u32 %v369, %v370
    %v372 = vshll.u32 920167782, %v357
    %v373 = vshrl.u32 1326507024, %v358
    %v374 = vor.u32 %v372, %v373
    %vm375 = vcmp.lt.s32.totalorder %v356, 1
    %vm376 = vcmp.lt.s32.totalorder %v356, 2
    %vm377 = vcmp.lt.s32.totalorder %v356, 3
    %vm378 = vcmp.lt.s32.totalorder %v356, 4
    %v379 = vsel %vm375, %v359, %v362
    %v380 = vsel %vm378, %v368, 2102212464
    %v381 = vsel %vm377, %v365, %v380
    %v382 = vsel %vm376, %v379, %v381
    %v383 = vsel %vm375, %v362, %v365
    %v384 = vsel %vm378, %v371, 920167782
    %v385 = vsel %vm377, %v368, %v384
    %v386 = vsel %vm376, %v383, %v385
    %v387 = vsel %vm375, %v365, %v368
    %v388 = vsel %vm378, %v374, 1326507024
    %v389 = vsel %vm377, %v371, %v388
    %v390 = vsel %vm376, %v387, %v389
    %v391 = vshll.u32 %v351, 8
    %v392 = vmul.u32.u64.compose %v391, %v390
    %v393 = vextract.low.u32 %v392
    %v394 = vextract.high.u32 %v392
    %v395 = vmul.u32.u64.compose %v391, %v386
    %v396 = vextract.low.u32 %v395
    %v397 = vextract.high.u32 %v395
    %v398 = vmul.u32 %v391, %v382
    %v399 = vadd.s32 %v394, %v396
    %vm400 = vc.u32 %v394, %v396
    %v401 = vadd.s32 %v397, 1
    %v402 = vsel %vm400, %v401, %v397
    %v403 = vadd.s32 %v398, %v402
    %v404 = vadd.s32 %v403, 536870912
    %v405 = vshrl.u32 %v404, 30
    %v406 = vshll.u32 %v405, 30
    %v407 = vsub.s32 %v403, %v406
    %vm408 = vcmp.lt.s32.totalorder %v407, 0
    %v409 = vsub.s32 0, %v407
    %v410 = vsel %vm408, %v409, %v407
    %v411 = vclz %v410
    %v412 = vsub.s32 %v411, 2
    %vm413 = vcmp.gt.s32.totalorder 0, %v412
    %v414 = vsel %vm413, 0, %v412
    %v415 = vsub.s32 32, %v414
    %v416 = vshll.u32 %v407, %v414
    %v417 = vshrl.u32 %v399, %v415
    %v418 = vor.u32 %v416, %v417
    %v419 = vsub.s32 4294967266, %v414
    %v420 = vadd.s32 %v419, 127
    %v421 = vshll.u32 %v420, 23
    %v422 = vor.u32 4788187, %v421
    %v423 = vand.u32 2147483647, %v422
    %v425 = vcvt.s32.f32 %v418
    %v426 = vmul.f32 %v425, %v423
    %v427 = vxor.u32 %v426, 2147483648
    %v428 = vsel %vm345, %v427, %v426
    %v429 = vsub.s32 4, %v405
    %v430 = vsel %vm345, %v429, %v405
    %v431 = vsel %vm344, %v206, %v428
    %v432 = vsel %vm344, 0, %v430
    %v433 = vcosq.f32.pop %v431
    %v434 = vsinq.f32.pop %v431
    %vm435 = vweird.f32 %v206
    %v436 = vadd.s32 %v432, 3
    %v437 = vand.u32 %v436, 3
    %vm438 = vcmp.lt.s32.totalorder %v437, 2
    %vm439 = vcmp.eq.s32.totalorder %v437, 0
    %v440 = vxor.u32 %v434, 2147483648
    %v441 = vsel %vm439, %v433, %v440
    %vm442 = vcmp.eq.s32.totalorder %v437, 2
    %v443 = vxor.u32 %v433, 2147483648
    %v444 = vsel %vm442, %v443, %v434
    %v445 = vsel %vm438, %v441, %v444
    %v446 = vsel %vm435, nan, %v445
    %v447 = vand.u32 2147483647, %v211
    %vm448 = vcmp.le.f32.partialorder %v447, 0.7853982
    %vm449 = vcmp.lt.s32.totalorder %v211, 0
    %v450 = vand.u32 %v211, 2139095040
    %v451 = vshrl.u32 %v450, 23
    %v452 = vsub.s32 %v451, 127
    %v453 = vand.u32 2147483647, %v211
    %v454 = vand.u32 %v453, 8388607
    %v455 = vor.u32 %v454, 8388608
    %v456 = vsub.s32 0, %v455
    %v457 = vadd.s32 %v452, 1
    %vm458 = vcmp.gt.s32.totalorder %v457, 0
    %v459 = vsel %vm458, %v457, 0
    %v460 = vshrl.u32 %v459, 5
    %v461 = vand.u32 %v459, 31
    %v462 = vsub.s32 32, %v461
    %v463 = vshrl.u32 683565275, %v462
    %v464 = vshll.u32 683565275, %v461
    %v465 = vshrl.u32 2475754826, %v462
    %v466 = vor.u32 %v464, %v465
    %v467 = vshll.u32 2475754826, %v461
    %v468 = vshrl.u32 2131351028, %v462
    %v469 = vor.u32 %v467, %v468
    %v470 = vshll.u32 2131351028, %v461
    %v471 = vshrl.u32 2102212464, %v462
    %v472 = vor.u32 %v470, %v471
    %v473 = vshll.u32 2102212464, %v461
    %v474 = vshrl.u32 920167782, %v462
    %v475 = vor.u32 %v473, %v474
    %v476 = vshll.u32 920167782, %v461
    %v477 = vshrl.u32 1326507024, %v462
    %v478 = vor.u32 %v476, %v477
    %vm479 = vcmp.lt.s32.totalorder %v460, 1
    %vm480 = vcmp.lt.s32.totalorder %v460, 2
    %vm481 = vcmp.lt.s32.totalorder %v460, 3
    %vm482 = vcmp.lt.s32.totalorder %v460, 4
    %v483 = vsel %vm479, %v463, %v466
    %v484 = vsel %vm482, %v472, 2102212464
    %v485 = vsel %vm481, %v469, %v484
    %v486 = vsel %vm480, %v483, %v485
    %v487 = vsel %vm479, %v466, %v469
    %v488 = vsel %vm482, %v475, 920167782
    %v489 = vsel %vm481, %v472, %v488
    %v490 = vsel %vm480, %v487, %v489
    %v491 = vsel %vm479, %v469, %v472
    %v492 = vsel %vm482, %v478, 1326507024
    %v493 = vsel %vm481, %v475, %v492
    %v494 = vsel %vm480, %v491, %v493
    %v495 = vshll.u32 %v455, 8
    %v496 = vmul.u32.u64.compose %v495, %v494
    %v497 = vextract.low.u32 %v496
    %v498 = vextract.high.u32 %v496
    %v499 = vmul.u32.u64.compose %v495, %v490
    %v500 = vextract.low.u32 %v499
    %v501 = vextract.high.u32 %v499
    %v502 = vmul.u32 %v495, %v486
    %v503 = vadd.s32 %v498, %v500
    %vm504 = vc.u32 %v498, %v500
    %v505 = vadd.s32 %v501, 1
    %v506 = vsel %vm504, %v505, %v501
    %v507 = vadd.s32 %v502, %v506
    %v508 = vadd.s32 %v507, 536870912
    %v509 = vshrl.u32 %v508, 30
    %v510 = vshll.u32 %v509, 30
    %v511 = vsub.s32 %v507, %v510
    %vm512 = vcmp.lt.s32.totalorder %v511, 0
    %v513 = vsub.s32 0, %v511
    %v514 = vsel %vm512, %v513, %v511
    %v515 = vclz %v514
    %v516 = vsub.s32 %v515, 2
    %vm517 = vcmp.gt.s32.totalorder 0, %v516
    %v518 = vsel %vm517, 0, %v516
    %v519 = vsub.s32 32, %v518
    %v520 = vshll.u32 %v511, %v518
    %v521 = vshrl.u32 %v503, %v519
    %v522 = vor.u32 %v520, %v521
    %v523 = vsub.s32 4294967266, %v518
    %v524 = vadd.s32 %v523, 127
    %v525 = vshll.u32 %v524, 23
    %v526 = vor.u32 4788187, %v525
    %v527 = vand.u32 2147483647, %v526
    %v529 = vcvt.s32.f32 %v522
    %v530 = vmul.f32 %v529, %v527
    %v531 = vxor.u32 %v530, 2147483648
    %v532 = vsel %vm449, %v531, %v530
    %v533 = vsub.s32 4, %v509
    %v534 = vsel %vm449, %v533, %v509
    %v535 = vsel %vm448, %v211, %v532
    %v536 = vsel %vm448, 0, %v534
    %v537 = vcosq.f32.pop %v535
    %v538 = vsinq.f32.pop %v535
    %vm539 = vweird.f32 %v211
    %v540 = vadd.s32 %v536, 3
    %v541 = vand.u32 %v540, 3
    %vm542 = vcmp.lt.s32.totalorder %v541, 2
    %vm543 = vcmp.eq.s32.totalorder %v541, 0
    %v544 = vxor.u32 %v538, 2147483648
    %v545 = vsel %vm543, %v537, %v544
    %vm546 = vcmp.eq.s32.totalorder %v541, 2
    %v547 = vxor.u32 %v537, 2147483648
    %v548 = vsel %vm546, %v547, %v538
    %v549 = vsel %vm542, %v545, %v548
    %v550 = vsel %vm539, nan, %v549
    %v551 = vand.u32 2147483647, %v216
    %vm552 = vcmp.le.f32.partialorder %v551, 0.7853982
    %vm553 = vcmp.lt.s32.totalorder %v216, 0
    %v554 = vand.u32 %v216, 2139095040
    %v555 = vshrl.u32 %v554, 23
    %v556 = vsub.s32 %v555, 127
    %v557 = vand.u32 2147483647, %v216
    %v558 = vand.u32 %v557, 8388607
    %v559 = vor.u32 %v558, 8388608
    %v560 = vsub.s32 0, %v559
    %v561 = vadd.s32 %v556, 1
    %vm562 = vcmp.gt.s32.totalorder %v561, 0
    %v563 = vsel %vm562, %v561, 0
    %v564 = vshrl.u32 %v563, 5
    %v565 = vand.u32 %v563, 31
    %v566 = vsub.s32 32, %v565
    %v567 = vshrl.u32 683565275, %v566
    %v568 = vshll.u32 683565275, %v565
    %v569 = vshrl.u32 2475754826, %v566
    %v570 = vor.u32 %v568, %v569
    %v571 = vshll.u32 2475754826, %v565
    %v572 = vshrl.u32 2131351028, %v566
    %v573 = vor.u32 %v571, %v572
    %v574 = vshll.u32 2131351028, %v565
    %v575 = vshrl.u32 2102212464, %v566
    %v576 = vor.u32 %v574, %v575
    %v577 = vshll.u32 2102212464, %v565
    %v578 = vshrl.u32 920167782, %v566
    %v579 = vor.u32 %v577, %v578
    %v580 = vshll.u32 920167782, %v565
    %v581 = vshrl.u32 1326507024, %v566
    %v582 = vor.u32 %v580, %v581
    %vm583 = vcmp.lt.s32.totalorder %v564, 1
    %vm584 = vcmp.lt.s32.totalorder %v564, 2
    %vm585 = vcmp.lt.s32.totalorder %v564, 3
    %vm586 = vcmp.lt.s32.totalorder %v564, 4
    %v587 = vsel %vm583, %v567, %v570
    %v588 = vsel %vm586, %v576, 2102212464
    %v589 = vsel %vm585, %v573, %v588
    %v590 = vsel %vm584, %v587, %v589
    %v591 = vsel %vm583, %v570, %v573
    %v592 = vsel %vm586, %v579, 920167782
    %v593 = vsel %vm585, %v576, %v592
    %v594 = vsel %vm584, %v591, %v593
    %v595 = vsel %vm583, %v573, %v576
    %v596 = vsel %vm586, %v582, 1326507024
    %v597 = vsel %vm585, %v579, %v596
    %v598 = vsel %vm584, %v595, %v597
    %v599 = vshll.u32 %v559, 8
    %v600 = vmul.u32.u64.compose %v599, %v598
    %v601 = vextract.low.u32 %v600
    %v602 = vextract.high.u32 %v600
    %v603 = vmul.u32.u64.compose %v599, %v594
    %v604 = vextract.low.u32 %v603
    %v605 = vextract.high.u32 %v603
    %v606 = vmul.u32 %v599, %v590
    %v607 = vadd.s32 %v602, %v604
    %vm608 = vc.u32 %v602, %v604
    %v609 = vadd.s32 %v605, 1
    %v610 = vsel %vm608, %v609, %v605
    %v611 = vadd.s32 %v606, %v610
    %v612 = vadd.s32 %v611, 536870912
    %v613 = vshrl.u32 %v612, 30
    %v614 = vshll.u32 %v613, 30
    %v615 = vsub.s32 %v611, %v614
    %vm616 = vcmp.lt.s32.totalorder %v615, 0
    %v617 = vsub.s32 0, %v615
    %v618 = vsel %vm616, %v617, %v615
    %v619 = vclz %v618
    %v620 = vsub.s32 %v619, 2
    %vm621 = vcmp.gt.s32.totalorder 0, %v620
    %v622 = vsel %vm621, 0, %v620
    %v623 = vsub.s32 32, %v622
    %v624 = vshll.u32 %v615, %v622
    %v625 = vshrl.u32 %v607, %v623
    %v626 = vor.u32 %v624, %v625
    %v627 = vsub.s32 4294967266, %v622
    %v628 = vadd.s32 %v627, 127
    %v629 = vshll.u32 %v628, 23
    %v630 = vor.u32 4788187, %v629
    %v631 = vand.u32 2147483647, %v630
    %v633 = vcvt.s32.f32 %v626
    %v634 = vmul.f32 %v633, %v631
    %v635 = vxor.u32 %v634, 2147483648
    %v636 = vsel %vm553, %v635, %v634
    %v637 = vsub.s32 4, %v613
    %v638 = vsel %vm553, %v637, %v613
    %v639 = vsel %vm552, %v216, %v636
    %v640 = vsel %vm552, 0, %v638
    %v641 = vcosq.f32.pop %v639
    %v642 = vsinq.f32.pop %v639
    %vm643 = vweird.f32 %v216
    %v644 = vadd.s32 %v640, 3
    %v645 = vand.u32 %v644, 3
    %vm646 = vcmp.lt.s32.totalorder %v645, 2
    %vm647 = vcmp.eq.s32.totalorder %v645, 0
    %v648 = vxor.u32 %v642, 2147483648
    %v649 = vsel %vm647, %v641, %v648
    %vm650 = vcmp.eq.s32.totalorder %v645, 2
    %v651 = vxor.u32 %v641, 2147483648
    %v652 = vsel %vm650, %v651, %v642
    %v653 = vsel %vm646, %v649, %v652
    %v654 = vsel %vm643, nan, %v653
    %v655 = vand.u32 2147483647, %v221
    %vm656 = vcmp.le.f32.partialorder %v655, 0.7853982
    %vm657 = vcmp.lt.s32.totalorder %v221, 0
    %v658 = vand.u32 %v221, 2139095040
    %v659 = vshrl.u32 %v658, 23
    %v660 = vsub.s32 %v659, 127
    %v661 = vand.u32 2147483647, %v221
    %v662 = vand.u32 %v661, 8388607
    %v663 = vor.u32 %v662, 8388608
    %v664 = vsub.s32 0, %v663
    %v665 = vadd.s32 %v660, 1
    %vm666 = vcmp.gt.s32.totalorder %v665, 0
    %v667 = vsel %vm666, %v665, 0
    %v668 = vshrl.u32 %v667, 5
    %v669 = vand.u32 %v667, 31
    %v670 = vsub.s32 32, %v669
    %v671 = vshrl.u32 683565275, %v670
    %v672 = vshll.u32 683565275, %v669
    %v673 = vshrl.u32 2475754826, %v670
    %v674 = vor.u32 %v672, %v673
    %v675 = vshll.u32 2475754826, %v669
    %v676 = vshrl.u32 2131351028, %v670
    %v677 = vor.u32 %v675, %v676
    %v678 = vshll.u32 2131351028, %v669
    %v679 = vshrl.u32 2102212464, %v670
    %v680 = vor.u32 %v678, %v679
    %v681 = vshll.u32 2102212464, %v669
    %v682 = vshrl.u32 920167782, %v670
    %v683 = vor.u32 %v681, %v682
    %v684 = vshll.u32 920167782, %v669
    %v685 = vshrl.u32 1326507024, %v670
    %v686 = vor.u32 %v684, %v685
    %vm687 = vcmp.lt.s32.totalorder %v668, 1
    %vm688 = vcmp.lt.s32.totalorder %v668, 2
    %vm689 = vcmp.lt.s32.totalorder %v668, 3
    %vm690 = vcmp.lt.s32.totalorder %v668, 4
    %v691 = vsel %vm687, %v671, %v674
    %v692 = vsel %vm690, %v680, 2102212464
    %v693 = vsel %vm689, %v677, %v692
    %v694 = vsel %vm688, %v691, %v693
    %v695 = vsel %vm687, %v674, %v677
    %v696 = vsel %vm690, %v683, 920167782
    %v697 = vsel %vm689, %v680, %v696
    %v698 = vsel %vm688, %v695, %v697
    %v699 = vsel %vm687, %v677, %v680
    %v700 = vsel %vm690, %v686, 1326507024
    %v701 = vsel %vm689, %v683, %v700
    %v702 = vsel %vm688, %v699, %v701
    %v703 = vshll.u32 %v663, 8
    %v704 = vmul.u32.u64.compose %v703, %v702
    %v705 = vextract.low.u32 %v704
    %v706 = vextract.high.u32 %v704
    %v707 = vmul.u32.u64.compose %v703, %v698
    %v708 = vextract.low.u32 %v707
    %v709 = vextract.high.u32 %v707
    %v710 = vmul.u32 %v703, %v694
    %v711 = vadd.s32 %v706, %v708
    %vm712 = vc.u32 %v706, %v708
    %v713 = vadd.s32 %v709, 1
    %v714 = vsel %vm712, %v713, %v709
    %v715 = vadd.s32 %v710, %v714
    %v716 = vadd.s32 %v715, 536870912
    %v717 = vshrl.u32 %v716, 30
    %v718 = vshll.u32 %v717, 30
    %v719 = vsub.s32 %v715, %v718
    %vm720 = vcmp.lt.s32.totalorder %v719, 0
    %v721 = vsub.s32 0, %v719
    %v722 = vsel %vm720, %v721, %v719
    %v723 = vclz %v722
    %v724 = vsub.s32 %v723, 2
    %vm725 = vcmp.gt.s32.totalorder 0, %v724
    %v726 = vsel %vm725, 0, %v724
    %v727 = vsub.s32 32, %v726
    %v728 = vshll.u32 %v719, %v726
    %v729 = vshrl.u32 %v711, %v727
    %v730 = vor.u32 %v728, %v729
    %v731 = vsub.s32 4294967266, %v726
    %v732 = vadd.s32 %v731, 127
    %v733 = vshll.u32 %v732, 23
    %v734 = vor.u32 4788187, %v733
    %v735 = vand.u32 2147483647, %v734
    %v737 = vcvt.s32.f32 %v730
    %v738 = vmul.f32 %v737, %v735
    %v739 = vxor.u32 %v738, 2147483648
    %v740 = vsel %vm657, %v739, %v738
    %v741 = vsub.s32 4, %v717
    %v742 = vsel %vm657, %v741, %v717
    %v743 = vsel %vm656, %v221, %v740
    %v744 = vsel %vm656, 0, %v742
    %v745 = vcosq.f32.pop %v743
    %v746 = vsinq.f32.pop %v743
    %vm747 = vweird.f32 %v221
    %v748 = vadd.s32 %v744, 3
    %v749 = vand.u32 %v748, 3
    %vm750 = vcmp.lt.s32.totalorder %v749, 2
    %vm751 = vcmp.eq.s32.totalorder %v749, 0
    %v752 = vxor.u32 %v746, 2147483648
    %v753 = vsel %vm751, %v745, %v752
    %vm754 = vcmp.eq.s32.totalorder %v749, 2
    %v755 = vxor.u32 %v745, 2147483648
    %v756 = vsel %vm754, %v755, %v746
    %v757 = vsel %vm750, %v753, %v756
    %v758 = vsel %vm747, nan, %v757
    %v759 = vand.u32 2147483647, %v226
    %vm760 = vcmp.le.f32.partialorder %v759, 0.7853982
    %vm761 = vcmp.lt.s32.totalorder %v226, 0
    %v762 = vand.u32 %v226, 2139095040
    %v763 = vshrl.u32 %v762, 23
    %v764 = vsub.s32 %v763, 127
    %v765 = vand.u32 2147483647, %v226
    %v766 = vand.u32 %v765, 8388607
    %v767 = vor.u32 %v766, 8388608
    %v768 = vsub.s32 0, %v767
    %v769 = vadd.s32 %v764, 1
    %vm770 = vcmp.gt.s32.totalorder %v769, 0
    %v771 = vsel %vm770, %v769, 0
    %v772 = vshrl.u32 %v771, 5
    %v773 = vand.u32 %v771, 31
    %v774 = vsub.s32 32, %v773
    %v775 = vshrl.u32 683565275, %v774
    %v776 = vshll.u32 683565275, %v773
    %v777 = vshrl.u32 2475754826, %v774
    %v778 = vor.u32 %v776, %v777
    %v779 = vshll.u32 2475754826, %v773
    %v780 = vshrl.u32 2131351028, %v774
    %v781 = vor.u32 %v779, %v780
    %v782 = vshll.u32 2131351028, %v773
    %v783 = vshrl.u32 2102212464, %v774
    %v784 = vor.u32 %v782, %v783
    %v785 = vshll.u32 2102212464, %v773
    %v786 = vshrl.u32 920167782, %v774
    %v787 = vor.u32 %v785, %v786
    %v788 = vshll.u32 920167782, %v773
    %v789 = vshrl.u32 1326507024, %v774
    %v790 = vor.u32 %v788, %v789
    %vm791 = vcmp.lt.s32.totalorder %v772, 1
    %vm792 = vcmp.lt.s32.totalorder %v772, 2
    %vm793 = vcmp.lt.s32.totalorder %v772, 3
    %vm794 = vcmp.lt.s32.totalorder %v772, 4
    %v795 = vsel %vm791, %v775, %v778
    %v796 = vsel %vm794, %v784, 2102212464
    %v797 = vsel %vm793, %v781, %v796
    %v798 = vsel %vm792, %v795, %v797
    %v799 = vsel %vm791, %v778, %v781
    %v800 = vsel %vm794, %v787, 920167782
    %v801 = vsel %vm793, %v784, %v800
    %v802 = vsel %vm792, %v799, %v801
    %v803 = vsel %vm791, %v781, %v784
    %v804 = vsel %vm794, %v790, 1326507024
    %v805 = vsel %vm793, %v787, %v804
    %v806 = vsel %vm792, %v803, %v805
    %v807 = vshll.u32 %v767, 8
    %v808 = vmul.u32.u64.compose %v807, %v806
    %v809 = vextract.low.u32 %v808
    %v810 = vextract.high.u32 %v808
    %v811 = vmul.u32.u64.compose %v807, %v802
    %v812 = vextract.low.u32 %v811
    %v813 = vextract.high.u32 %v811
    %v814 = vmul.u32 %v807, %v798
    %v815 = vadd.s32 %v810, %v812
    %vm816 = vc.u32 %v810, %v812
    %v817 = vadd.s32 %v813, 1
    %v818 = vsel %vm816, %v817, %v813
    %v819 = vadd.s32 %v814, %v818
    %v820 = vadd.s32 %v819, 536870912
    %v821 = vshrl.u32 %v820, 30
    %v822 = vshll.u32 %v821, 30
    %v823 = vsub.s32 %v819, %v822
    %vm824 = vcmp.lt.s32.totalorder %v823, 0
    %v825 = vsub.s32 0, %v823
    %v826 = vsel %vm824, %v825, %v823
    %v827 = vclz %v826
    %v828 = vsub.s32 %v827, 2
    %vm829 = vcmp.gt.s32.totalorder 0, %v828
    %v830 = vsel %vm829, 0, %v828
    %v831 = vsub.s32 32, %v830
    %v832 = vshll.u32 %v823, %v830
    %v833 = vshrl.u32 %v815, %v831
    %v834 = vor.u32 %v832, %v833
    %v835 = vsub.s32 4294967266, %v830
    %v836 = vadd.s32 %v835, 127
    %v837 = vshll.u32 %v836, 23
    %v838 = vor.u32 4788187, %v837
    %v839 = vand.u32 2147483647, %v838
    %v841 = vcvt.s32.f32 %v834
    %v842 = vmul.f32 %v841, %v839
    %v843 = vxor.u32 %v842, 2147483648
    %v844 = vsel %vm761, %v843, %v842
    %v845 = vsub.s32 4, %v821
    %v846 = vsel %vm761, %v845, %v821
    %v847 = vsel %vm760, %v226, %v844
    %v848 = vsel %vm760, 0, %v846
    %v849 = vcosq.f32.pop %v847
    %v850 = vsinq.f32.pop %v847
    %vm851 = vweird.f32 %v226
    %v852 = vadd.s32 %v848, 3
    %v853 = vand.u32 %v852, 3
    %vm854 = vcmp.lt.s32.totalorder %v853, 2
    %vm855 = vcmp.eq.s32.totalorder %v853, 0
    %v856 = vxor.u32 %v850, 2147483648
    %v857 = vsel %vm855, %v849, %v856
    %vm858 = vcmp.eq.s32.totalorder %v853, 2
    %v859 = vxor.u32 %v849, 2147483648
    %v860 = vsel %vm858, %v859, %v850
    %v861 = vsel %vm854, %v857, %v860
    %v862 = vsel %vm851, nan, %v861
    %v863 = vand.u32 2147483647, %v231
    %vm864 = vcmp.le.f32.partialorder %v863, 0.7853982
    %vm865 = vcmp.lt.s32.totalorder %v231, 0
    %v866 = vand.u32 %v231, 2139095040
    %v867 = vshrl.u32 %v866, 23
    %v868 = vsub.s32 %v867, 127
    %v869 = vand.u32 2147483647, %v231
    %v870 = vand.u32 %v869, 8388607
    %v871 = vor.u32 %v870, 8388608
    %v872 = vsub.s32 0, %v871
    %v873 = vadd.s32 %v868, 1
    %vm874 = vcmp.gt.s32.totalorder %v873, 0
    %v875 = vsel %vm874, %v873, 0
    %v876 = vshrl.u32 %v875, 5
    %v877 = vand.u32 %v875, 31
    %v878 = vsub.s32 32, %v877
    %v879 = vshrl.u32 683565275, %v878
    %v880 = vshll.u32 683565275, %v877
    %v881 = vshrl.u32 2475754826, %v878
    %v882 = vor.u32 %v880, %v881
    %v883 = vshll.u32 2475754826, %v877
    %v884 = vshrl.u32 2131351028, %v878
    %v885 = vor.u32 %v883, %v884
    %v886 = vshll.u32 2131351028, %v877
    %v887 = vshrl.u32 2102212464, %v878
    %v888 = vor.u32 %v886, %v887
    %v889 = vshll.u32 2102212464, %v877
    %v890 = vshrl.u32 920167782, %v878
    %v891 = vor.u32 %v889, %v890
    %v892 = vshll.u32 920167782, %v877
    %v893 = vshrl.u32 1326507024, %v878
    %v894 = vor.u32 %v892, %v893
    %vm895 = vcmp.lt.s32.totalorder %v876, 1
    %vm896 = vcmp.lt.s32.totalorder %v876, 2
    %vm897 = vcmp.lt.s32.totalorder %v876, 3
    %vm898 = vcmp.lt.s32.totalorder %v876, 4
    %v899 = vsel %vm895, %v879, %v882
    %v900 = vsel %vm898, %v888, 2102212464
    %v901 = vsel %vm897, %v885, %v900
    %v902 = vsel %vm896, %v899, %v901
    %v903 = vsel %vm895, %v882, %v885
    %v904 = vsel %vm898, %v891, 920167782
    %v905 = vsel %vm897, %v888, %v904
    %v906 = vsel %vm896, %v903, %v905
    %v907 = vsel %vm895, %v885, %v888
    %v908 = vsel %vm898, %v894, 1326507024
    %v909 = vsel %vm897, %v891, %v908
    %v910 = vsel %vm896, %v907, %v909
    %v911 = vshll.u32 %v871, 8
    %v912 = vmul.u32.u64.compose %v911, %v910
    %v913 = vextract.low.u32 %v912
    %v914 = vextract.high.u32 %v912
    %v915 = vmul.u32.u64.compose %v911, %v906
    %v916 = vextract.low.u32 %v915
    %v917 = vextract.high.u32 %v915
    %v918 = vmul.u32 %v911, %v902
    %v919 = vadd.s32 %v914, %v916
    %vm920 = vc.u32 %v914, %v916
    %v921 = vadd.s32 %v917, 1
    %v922 = vsel %vm920, %v921, %v917
    %v923 = vadd.s32 %v918, %v922
    %v924 = vadd.s32 %v923, 536870912
    %v925 = vshrl.u32 %v924, 30
    %v926 = vshll.u32 %v925, 30
    %v927 = vsub.s32 %v923, %v926
    %vm928 = vcmp.lt.s32.totalorder %v927, 0
    %v929 = vsub.s32 0, %v927
    %v930 = vsel %vm928, %v929, %v927
    %v931 = vclz %v930
    %v932 = vsub.s32 %v931, 2
    %vm933 = vcmp.gt.s32.totalorder 0, %v932
    %v934 = vsel %vm933, 0, %v932
    %v935 = vsub.s32 32, %v934
    %v936 = vshll.u32 %v927, %v934
    %v937 = vshrl.u32 %v919, %v935
    %v938 = vor.u32 %v936, %v937
    %v939 = vsub.s32 4294967266, %v934
    %v940 = vadd.s32 %v939, 127
    %v941 = vshll.u32 %v940, 23
    %v942 = vor.u32 4788187, %v941
    %v943 = vand.u32 2147483647, %v942
    %v945 = vcvt.s32.f32 %v938
    %v946 = vmul.f32 %v945, %v943
    %v947 = vxor.u32 %v946, 2147483648
    %v948 = vsel %vm865, %v947, %v946
    %v949 = vsub.s32 4, %v925
    %v950 = vsel %vm865, %v949, %v925
    %v951 = vsel %vm864, %v231, %v948
    %v952 = vsel %vm864, 0, %v950
    %v953 = vcosq.f32.pop %v951
    %v954 = vsinq.f32.pop %v951
    %vm955 = vweird.f32 %v231
    %v956 = vadd.s32 %v952, 3
    %v957 = vand.u32 %v956, 3
    %vm958 = vcmp.lt.s32.totalorder %v957, 2
    %vm959 = vcmp.eq.s32.totalorder %v957, 0
    %v960 = vxor.u32 %v954, 2147483648
    %v961 = vsel %vm959, %v953, %v960
    %vm962 = vcmp.eq.s32.totalorder %v957, 2
    %v963 = vxor.u32 %v953, 2147483648
    %v964 = vsel %vm962, %v963, %v954
    %v965 = vsel %vm958, %v961, %v964
    %v966 = vsel %vm955, nan, %v965
    %v967 = vand.u32 2147483647, %v236
    %vm968 = vcmp.le.f32.partialorder %v967, 0.7853982
    %vm969 = vcmp.lt.s32.totalorder %v236, 0
    %v970 = vand.u32 %v236, 2139095040
    %v971 = vshrl.u32 %v970, 23
    %v972 = vsub.s32 %v971, 127
    %v973 = vand.u32 2147483647, %v236
    %v974 = vand.u32 %v973, 8388607
    %v975 = vor.u32 %v974, 8388608
    %v976 = vsub.s32 0, %v975
    %v977 = vadd.s32 %v972, 1
    %vm978 = vcmp.gt.s32.totalorder %v977, 0
    %v979 = vsel %vm978, %v977, 0
    %v980 = vshrl.u32 %v979, 5
    %v981 = vand.u32 %v979, 31
    %v982 = vsub.s32 32, %v981
    %v983 = vshrl.u32 683565275, %v982
    %v984 = vshll.u32 683565275, %v981
    %v985 = vshrl.u32 2475754826, %v982
    %v986 = vor.u32 %v984, %v985
    %v987 = vshll.u32 2475754826, %v981
    %v988 = vshrl.u32 2131351028, %v982
    %v989 = vor.u32 %v987, %v988
    %v990 = vshll.u32 2131351028, %v981
    %v991 = vshrl.u32 2102212464, %v982
    %v992 = vor.u32 %v990, %v991
    %v993 = vshll.u32 2102212464, %v981
    %v994 = vshrl.u32 920167782, %v982
    %v995 = vor.u32 %v993, %v994
    %v996 = vshll.u32 920167782, %v981
    %v997 = vshrl.u32 1326507024, %v982
    %v998 = vor.u32 %v996, %v997
    %vm999 = vcmp.lt.s32.totalorder %v980, 1
    %vm1000 = vcmp.lt.s32.totalorder %v980, 2
    %vm1001 = vcmp.lt.s32.totalorder %v980, 3
    %vm1002 = vcmp.lt.s32.totalorder %v980, 4
    %v1003 = vsel %vm999, %v983, %v986
    %v1004 = vsel %vm1002, %v992, 2102212464
    %v1005 = vsel %vm1001, %v989, %v1004
    %v1006 = vsel %vm1000, %v1003, %v1005
    %v1007 = vsel %vm999, %v986, %v989
    %v1008 = vsel %vm1002, %v995, 920167782
    %v1009 = vsel %vm1001, %v992, %v1008
    %v1010 = vsel %vm1000, %v1007, %v1009
    %v1011 = vsel %vm999, %v989, %v992
    %v1012 = vsel %vm1002, %v998, 1326507024
    %v1013 = vsel %vm1001, %v995, %v1012
    %v1014 = vsel %vm1000, %v1011, %v1013
    %v1015 = vshll.u32 %v975, 8
    %v1016 = vmul.u32.u64.compose %v1015, %v1014
    %v1017 = vextract.low.u32 %v1016
    %v1018 = vextract.high.u32 %v1016
    %v1019 = vmul.u32.u64.compose %v1015, %v1010
    %v1020 = vextract.low.u32 %v1019
    %v1021 = vextract.high.u32 %v1019
    %v1022 = vmul.u32 %v1015, %v1006
    %v1023 = vadd.s32 %v1018, %v1020
    %vm1024 = vc.u32 %v1018, %v1020
    %v1025 = vadd.s32 %v1021, 1
    %v1026 = vsel %vm1024, %v1025, %v1021
    %v1027 = vadd.s32 %v1022, %v1026
    %v1028 = vadd.s32 %v1027, 536870912
    %v1029 = vshrl.u32 %v1028, 30
    %v1030 = vshll.u32 %v1029, 30
    %v1031 = vsub.s32 %v1027, %v1030
    %vm1032 = vcmp.lt.s32.totalorder %v1031, 0
    %v1033 = vsub.s32 0, %v1031
    %v1034 = vsel %vm1032, %v1033, %v1031
    %v1035 = vclz %v1034
    %v1036 = vsub.s32 %v1035, 2
    %vm1037 = vcmp.gt.s32.totalorder 0, %v1036
    %v1038 = vsel %vm1037, 0, %v1036
    %v1039 = vsub.s32 32, %v1038
    %v1040 = vshll.u32 %v1031, %v1038
    %v1041 = vshrl.u32 %v1023, %v1039
    %v1042 = vor.u32 %v1040, %v1041
    %v1043 = vsub.s32 4294967266, %v1038
    %v1044 = vadd.s32 %v1043, 127
    %v1045 = vshll.u32 %v1044, 23
    %v1046 = vor.u32 4788187, %v1045
    %v1047 = vand.u32 2147483647, %v1046
    %v1049 = vcvt.s32.f32 %v1042
    %v1050 = vmul.f32 %v1049, %v1047
    %v1051 = vxor.u32 %v1050, 2147483648
    %v1052 = vsel %vm969, %v1051, %v1050
    %v1053 = vsub.s32 4, %v1029
    %v1054 = vsel %vm969, %v1053, %v1029
    %v1055 = vsel %vm968, %v236, %v1052
    %v1056 = vsel %vm968, 0, %v1054
    %v1057 = vcosq.f32.pop %v1055
    %v1058 = vsinq.f32.pop %v1055
    %vm1059 = vweird.f32 %v236
    %v1060 = vadd.s32 %v1056, 3
    %v1061 = vand.u32 %v1060, 3
    %vm1062 = vcmp.lt.s32.totalorder %v1061, 2
    %vm1063 = vcmp.eq.s32.totalorder %v1061, 0
    %v1064 = vxor.u32 %v1058, 2147483648
    %v1065 = vsel %vm1063, %v1057, %v1064
    %vm1066 = vcmp.eq.s32.totalorder %v1061, 2
    %v1067 = vxor.u32 %v1057, 2147483648
    %v1068 = vsel %vm1066, %v1067, %v1058
    %v1069 = vsel %vm1062, %v1065, %v1068
    %v1070 = vsel %vm1059, nan, %v1069
    %v1071 = vld [vmem:[%s3] sm:$0xff]
    %v1072 = vld [vmem:[%s3 + $0x8] sm:$0xff]
    %v1073 = vld [vmem:[%s3 + $0x10] sm:$0xff]
    %v1074 = vld [vmem:[%s3 + $0x18] sm:$0xff]
    %v1075 = vld [vmem:[%s3 + $0x20] sm:$0xff]
    %v1076 = vld [vmem:[%s3 + $0x28] sm:$0xff]
    %v1077 = vld [vmem:[%s3 + $0x30] sm:$0xff]
    %v1078 = vld [vmem:[%s3 + $0x38] sm:$0xff]
    %v1079 = vld [vmem:[%s4] sm:$0xff]
    %v1080 = vld [vmem:[%s4 + $0x8] sm:$0xff]
    %v1081 = vld [vmem:[%s4 + $0x10] sm:$0xff]
    %v1082 = vld [vmem:[%s4 + $0x18] sm:$0xff]
    %v1083 = vld [vmem:[%s4 + $0x20] sm:$0xff]
    %v1084 = vld [vmem:[%s4 + $0x28] sm:$0xff]
    %v1085 = vld [vmem:[%s4 + $0x30] sm:$0xff]
    %v1086 = vld [vmem:[%s4 + $0x38] sm:$0xff]
    %1088 = vset.pattern.permute.xlu0 0
    %1089 = vperm.xlu0 %1088, %v1079
    %v1090 = vpop.permute.xlu0 %1089
    %1093 = vset.pattern.permute.xlu0 0
    %1094 = vperm.xlu0 %1093, %v1080
    %v1095 = vpop.permute.xlu0 %1094
    %1098 = vset.pattern.permute.xlu0 0
    %1099 = vperm.xlu0 %1098, %v1081
    %v1100 = vpop.permute.xlu0 %1099
    %1103 = vset.pattern.permute.xlu0 0
    %1104 = vperm.xlu0 %1103, %v1082
    %v1105 = vpop.permute.xlu0 %1104
    %1108 = vset.pattern.permute.xlu0 0
    %1109 = vperm.xlu0 %1108, %v1083
    %v1110 = vpop.permute.xlu0 %1109
    %1113 = vset.pattern.permute.xlu0 0
    %1114 = vperm.xlu0 %1113, %v1084
    %v1115 = vpop.permute.xlu0 %1114
    %1118 = vset.pattern.permute.xlu0 0
    %1119 = vperm.xlu0 %1118, %v1085
    %v1120 = vpop.permute.xlu0 %1119
    %1123 = vset.pattern.permute.xlu0 0
    %1124 = vperm.xlu0 %1123, %v1086
    %v1125 = vpop.permute.xlu0 %1124
    %v1128 = vsel %vm109, %v1071, 0
    %v1131 = vsel %vm109, %v1072, 0
    %v1134 = vsel %vm109, %v1073, 0
    %v1137 = vsel %vm109, %v1074, 0
    %v1140 = vsel %vm109, %v1075, 0
    %v1143 = vsel %vm109, %v1076, 0
    %v1146 = vsel %vm109, %v1077, 0
    %v1149 = vsel %vm109, %v1078, 0
    %1151 = vmatprep.subr.mxu0 0.0
    %1152 = vmatpush1.msra.mxu0 %v342
    %1153 = vmatprep.subr.mxu0 0.0
    %1154 = vmatpush1.msra.mxu0 %v446
    %1155 = vmatprep.subr.mxu0 0.0
    %1156 = vmatpush1.msra.mxu0 %v550
    %1157 = vmatprep.subr.mxu0 0.0
    %1158 = vmatpush1.msra.mxu0 %v654
    %1159 = vmatprep.subr.mxu0 0.0
    %1160 = vmatpush1.msra.mxu0 %v758
    %1161 = vmatprep.subr.mxu0 0.0
    %1162 = vmatpush1.msra.mxu0 %v862
    %1163 = vmatprep.subr.mxu0 0.0
    %1164 = vmatpush1.msra.mxu0 %v966
    %1165 = vmatprep.subr.mxu0 0.0
    %1166 = vmatpush1.msra.mxu0 %v1070
    %1167 = vmatprep.subr.mxu0 0.0
    %1168 = vmatpush1.msra.mxu0 0.0
    %1169 = vmatprep.subr.mxu0 0.0
    %1170 = vmatpush1.msra.mxu0 0.0
    %1171 = vmatprep.subr.mxu0 0.0
    %1172 = vmatpush1.msra.mxu0 0.0
    %1173 = vmatprep.subr.mxu0 0.0
    %1174 = vmatpush1.msra.mxu0 0.0
    %1175 = vmatprep.subr.mxu0 0.0
    %1176 = vmatpush1.msra.mxu0 0.0
    %1177 = vmatprep.subr.mxu0 0.0
    %1178 = vmatpush1.msra.mxu0 0.0
    %1179 = vmatprep.subr.mxu0 0.0
    %1180 = vmatpush1.msra.mxu0 0.0
    %1181 = vmatprep.subr.mxu0 0.0
    %1182 = vmatpush1.msra.mxu0 0.0
    %1183 = vmatprep.subr.mxu0 0.0
    %1184 = vmatpush1.msra.mxu0 0.0
    %1185 = vmatprep.subr.mxu0 0.0
    %1186 = vmatpush1.msra.mxu0 0.0
    %1187 = vmatprep.subr.mxu0 0.0
    %1188 = vmatpush1.msra.mxu0 0.0
    %1189 = vmatprep.subr.mxu0 0.0
    %1190 = vmatpush1.msra.mxu0 0.0
    %1191 = vmatprep.subr.mxu0 0.0
    %1192 = vmatpush1.msra.mxu0 0.0
    %1193 = vmatprep.subr.mxu0 0.0
    %1194 = vmatpush1.msra.mxu0 0.0
    %1195 = vmatprep.subr.mxu0 0.0
    %1196 = vmatpush1.msra.mxu0 0.0
    %1197 = vmatprep.subr.mxu0 0.0
    %1198 = vmatpush1.msra.mxu0 0.0
    %1199 = vmatprep.subr.mxu0 0.0
    %1200 = vmatpush1.msra.mxu0 0.0
    %1201 = vmatprep.subr.mxu0 0.0
    %1202 = vmatpush1.msra.mxu0 0.0
    %1203 = vmatprep.subr.mxu0 0.0
    %1204 = vmatpush1.msra.mxu0 0.0
    %1205 = vmatprep.subr.mxu0 0.0
    %1206 = vmatpush1.msra.mxu0 0.0
    %1207 = vmatprep.subr.mxu0 0.0
    %1208 = vmatpush1.msra.mxu0 0.0
    %1209 = vmatprep.subr.mxu0 0.0
    %1210 = vmatpush1.msra.mxu0 0.0
    %1211 = vmatprep.subr.mxu0 0.0
    %1212 = vmatpush1.msra.mxu0 0.0
    %1213 = vmatprep.subr.mxu0 0.0
    %1214 = vmatpush1.msra.mxu0 0.0
    %1215 = vmatprep.mubr.f32.mxu0 0.0
    %1216 = vmatmul.mubr.f32.gmra.mrb[0].mxu0 %v1128
    %v1217 = vpop.f32.mrb[0].mxu0
    %v1218 = vadd.f32 %v1090, %v1217
    %v1219 = vpop.f32.mrb[0].mxu0
    %1220 = vmatprep.mubr.f32.mxu0 0.0
    %1221 = vmatmul.mubr.f32.gmra.mrb[0].mxu0 %v1131
    %v1222 = vpop.f32.mrb[0].mxu0
    %v1223 = vadd.f32 %v1095, %v1222
    %v1224 = vpop.f32.mrb[0].mxu0
    %1225 = vmatprep.mubr.f32.mxu0 0.0
    %1226 = vmatmul.mubr.f32.gmra.mrb[0].mxu0 %v1134
    %v1227 = vpop.f32.mrb[0].mxu0
    %v1228 = vadd.f32 %v1100, %v1227
    %v1229 = vpop.f32.mrb[0].mxu0
    %1230 = vmatprep.mubr.f32.mxu0 0.0
    %1231 = vmatmul.mubr.f32.gmra.mrb[0].mxu0 %v1137
    %v1232 = vpop.f32.mrb[0].mxu0
    %v1233 = vadd.f32 %v1105, %v1232
    %v1234 = vpop.f32.mrb[0].mxu0
    %1235 = vmatprep.mubr.f32.mxu0 0.0
    %1236 = vmatmul.mubr.f32.gmra.mrb[0].mxu0 %v1140
    %v1237 = vpop.f32.mrb[0].mxu0
    %v1238 = vadd.f32 %v1110, %v1237
    %v1239 = vpop.f32.mrb[0].mxu0
    %1240 = vmatprep.mubr.f32.mxu0 0.0
    %1241 = vmatmul.mubr.f32.gmra.mrb[0].mxu0 %v1143
    %v1242 = vpop.f32.mrb[0].mxu0
    %v1243 = vadd.f32 %v1115, %v1242
    %v1244 = vpop.f32.mrb[0].mxu0
    %1245 = vmatprep.mubr.f32.mxu0 0.0
    %1246 = vmatmul.mubr.f32.gmra.mrb[0].mxu0 %v1146
    %v1247 = vpop.f32.mrb[0].mxu0
    %v1248 = vadd.f32 %v1120, %v1247
    %v1249 = vpop.f32.mrb[0].mxu0
    %1250 = vmatprep.mubr.f32.mxu0 0.0
    %1251 = vmatmul.mubr.f32.gmra.mrb[0].mxu0 %v1149
    %v1252 = vpop.f32.mrb[0].mxu0
    %v1253 = vadd.f32 %v1125, %v1252
    %v1254 = vpop.f32.mrb[0].mxu0
    %1255 = vdwg.mxu0
    %v1256 = vand.u32 2147483647, %v1218
    %vm1257 = vcmp.le.f32.partialorder %v1256, 0.7853982
    %vm1258 = vcmp.lt.s32.totalorder %v1218, 0
    %v1259 = vand.u32 %v1218, 2139095040
    %v1260 = vshrl.u32 %v1259, 23
    %v1261 = vsub.s32 %v1260, 127
    %v1262 = vand.u32 2147483647, %v1218
    %v1263 = vand.u32 %v1262, 8388607
    %v1264 = vor.u32 %v1263, 8388608
    %v1265 = vsub.s32 0, %v1264
    %v1266 = vadd.s32 %v1261, 1
    %vm1267 = vcmp.gt.s32.totalorder %v1266, 0
    %v1268 = vsel %vm1267, %v1266, 0
    %v1269 = vshrl.u32 %v1268, 5
    %v1270 = vand.u32 %v1268, 31
    %v1271 = vsub.s32 32, %v1270
    %v1272 = vshrl.u32 683565275, %v1271
    %v1273 = vshll.u32 683565275, %v1270
    %v1274 = vshrl.u32 2475754826, %v1271
    %v1275 = vor.u32 %v1273, %v1274
    %v1276 = vshll.u32 2475754826, %v1270
    %v1277 = vshrl.u32 2131351028, %v1271
    %v1278 = vor.u32 %v1276, %v1277
    %v1279 = vshll.u32 2131351028, %v1270
    %v1280 = vshrl.u32 2102212464, %v1271
    %v1281 = vor.u32 %v1279, %v1280
    %v1282 = vshll.u32 2102212464, %v1270
    %v1283 = vshrl.u32 920167782, %v1271
    %v1284 = vor.u32 %v1282, %v1283
    %v1285 = vshll.u32 920167782, %v1270
    %v1286 = vshrl.u32 1326507024, %v1271
    %v1287 = vor.u32 %v1285, %v1286
    %vm1288 = vcmp.lt.s32.totalorder %v1269, 1
    %vm1289 = vcmp.lt.s32.totalorder %v1269, 2
    %vm1290 = vcmp.lt.s32.totalorder %v1269, 3
    %vm1291 = vcmp.lt.s32.totalorder %v1269, 4
    %v1292 = vsel %vm1288, %v1272, %v1275
    %v1293 = vsel %vm1291, %v1281, 2102212464
    %v1294 = vsel %vm1290, %v1278, %v1293
    %v1295 = vsel %vm1289, %v1292, %v1294
    %v1296 = vsel %vm1288, %v1275, %v1278
    %v1297 = vsel %vm1291, %v1284, 920167782
    %v1298 = vsel %vm1290, %v1281, %v1297
    %v1299 = vsel %vm1289, %v1296, %v1298
    %v1300 = vsel %vm1288, %v1278, %v1281
    %v1301 = vsel %vm1291, %v1287, 1326507024
    %v1302 = vsel %vm1290, %v1284, %v1301
    %v1303 = vsel %vm1289, %v1300, %v1302
    %v1304 = vshll.u32 %v1264, 8
    %v1305 = vmul.u32.u64.compose %v1304, %v1303
    %v1306 = vextract.low.u32 %v1305
    %v1307 = vextract.high.u32 %v1305
    %v1308 = vmul.u32.u64.compose %v1304, %v1299
    %v1309 = vextract.low.u32 %v1308
    %v1310 = vextract.high.u32 %v1308
    %v1311 = vmul.u32 %v1304, %v1295
    %v1312 = vadd.s32 %v1307, %v1309
    %vm1313 = vc.u32 %v1307, %v1309
    %v1314 = vadd.s32 %v1310, 1
    %v1315 = vsel %vm1313, %v1314, %v1310
    %v1316 = vadd.s32 %v1311, %v1315
    %v1317 = vadd.s32 %v1316, 536870912
    %v1318 = vshrl.u32 %v1317, 30
    %v1319 = vshll.u32 %v1318, 30
    %v1320 = vsub.s32 %v1316, %v1319
    %vm1321 = vcmp.lt.s32.totalorder %v1320, 0
    %v1322 = vsub.s32 0, %v1320
    %v1323 = vsel %vm1321, %v1322, %v1320
    %v1324 = vclz %v1323
    %v1325 = vsub.s32 %v1324, 2
    %vm1326 = vcmp.gt.s32.totalorder 0, %v1325
    %v1327 = vsel %vm1326, 0, %v1325
    %v1328 = vsub.s32 32, %v1327
    %v1329 = vshll.u32 %v1320, %v1327
    %v1330 = vshrl.u32 %v1312, %v1328
    %v1331 = vor.u32 %v1329, %v1330
    %v1332 = vsub.s32 4294967266, %v1327
    %v1333 = vadd.s32 %v1332, 127
    %v1334 = vshll.u32 %v1333, 23
    %v1335 = vor.u32 4788187, %v1334
    %v1336 = vand.u32 2147483647, %v1335
    %v1338 = vcvt.s32.f32 %v1331
    %v1339 = vmul.f32 %v1338, %v1336
    %v1340 = vxor.u32 %v1339, 2147483648
    %v1341 = vsel %vm1258, %v1340, %v1339
    %v1342 = vsub.s32 4, %v1318
    %v1343 = vsel %vm1258, %v1342, %v1318
    %v1344 = vsel %vm1257, %v1218, %v1341
    %v1345 = vsel %vm1257, 0, %v1343
    %v1346 = vcosq.f32.pop %v1344
    %v1347 = vsinq.f32.pop %v1344
    %vm1348 = vweird.f32 %v1218
    %v1349 = vadd.s32 %v1345, 3
    %v1350 = vand.u32 %v1349, 3
    %vm1351 = vcmp.lt.s32.totalorder %v1350, 2
    %vm1352 = vcmp.eq.s32.totalorder %v1350, 0
    %v1353 = vxor.u32 %v1347, 2147483648
    %v1354 = vsel %vm1352, %v1346, %v1353
    %vm1355 = vcmp.eq.s32.totalorder %v1350, 2
    %v1356 = vxor.u32 %v1346, 2147483648
    %v1357 = vsel %vm1355, %v1356, %v1347
    %v1358 = vsel %vm1351, %v1354, %v1357
    %v1359 = vsel %vm1348, nan, %v1358
    %v1360 = vand.u32 2147483647, %v1223
    %vm1361 = vcmp.le.f32.partialorder %v1360, 0.7853982
    %vm1362 = vcmp.lt.s32.totalorder %v1223, 0
    %v1363 = vand.u32 %v1223, 2139095040
    %v1364 = vshrl.u32 %v1363, 23
    %v1365 = vsub.s32 %v1364, 127
    %v1366 = vand.u32 2147483647, %v1223
    %v1367 = vand.u32 %v1366, 8388607
    %v1368 = vor.u32 %v1367, 8388608
    %v1369 = vsub.s32 0, %v1368
    %v1370 = vadd.s32 %v1365, 1
    %vm1371 = vcmp.gt.s32.totalorder %v1370, 0
    %v1372 = vsel %vm1371, %v1370, 0
    %v1373 = vshrl.u32 %v1372, 5
    %v1374 = vand.u32 %v1372, 31
    %v1375 = vsub.s32 32, %v1374
    %v1376 = vshrl.u32 683565275, %v1375
    %v1377 = vshll.u32 683565275, %v1374
    %v1378 = vshrl.u32 2475754826, %v1375
    %v1379 = vor.u32 %v1377, %v1378
    %v1380 = vshll.u32 2475754826, %v1374
    %v1381 = vshrl.u32 2131351028, %v1375
    %v1382 = vor.u32 %v1380, %v1381
    %v1383 = vshll.u32 2131351028, %v1374
    %v1384 = vshrl.u32 2102212464, %v1375
    %v1385 = vor.u32 %v1383, %v1384
    %v1386 = vshll.u32 2102212464, %v1374
    %v1387 = vshrl.u32 920167782, %v1375
    %v1388 = vor.u32 %v1386, %v1387
    %v1389 = vshll.u32 920167782, %v1374
    %v1390 = vshrl.u32 1326507024, %v1375
    %v1391 = vor.u32 %v1389, %v1390
    %vm1392 = vcmp.lt.s32.totalorder %v1373, 1
    %vm1393 = vcmp.lt.s32.totalorder %v1373, 2
    %vm1394 = vcmp.lt.s32.totalorder %v1373, 3
    %vm1395 = vcmp.lt.s32.totalorder %v1373, 4
    %v1396 = vsel %vm1392, %v1376, %v1379
    %v1397 = vsel %vm1395, %v1385, 2102212464
    %v1398 = vsel %vm1394, %v1382, %v1397
    %v1399 = vsel %vm1393, %v1396, %v1398
    %v1400 = vsel %vm1392, %v1379, %v1382
    %v1401 = vsel %vm1395, %v1388, 920167782
    %v1402 = vsel %vm1394, %v1385, %v1401
    %v1403 = vsel %vm1393, %v1400, %v1402
    %v1404 = vsel %vm1392, %v1382, %v1385
    %v1405 = vsel %vm1395, %v1391, 1326507024
    %v1406 = vsel %vm1394, %v1388, %v1405
    %v1407 = vsel %vm1393, %v1404, %v1406
    %v1408 = vshll.u32 %v1368, 8
    %v1409 = vmul.u32.u64.compose %v1408, %v1407
    %v1410 = vextract.low.u32 %v1409
    %v1411 = vextract.high.u32 %v1409
    %v1412 = vmul.u32.u64.compose %v1408, %v1403
    %v1413 = vextract.low.u32 %v1412
    %v1414 = vextract.high.u32 %v1412
    %v1415 = vmul.u32 %v1408, %v1399
    %v1416 = vadd.s32 %v1411, %v1413
    %vm1417 = vc.u32 %v1411, %v1413
    %v1418 = vadd.s32 %v1414, 1
    %v1419 = vsel %vm1417, %v1418, %v1414
    %v1420 = vadd.s32 %v1415, %v1419
    %v1421 = vadd.s32 %v1420, 536870912
    %v1422 = vshrl.u32 %v1421, 30
    %v1423 = vshll.u32 %v1422, 30
    %v1424 = vsub.s32 %v1420, %v1423
    %vm1425 = vcmp.lt.s32.totalorder %v1424, 0
    %v1426 = vsub.s32 0, %v1424
    %v1427 = vsel %vm1425, %v1426, %v1424
    %v1428 = vclz %v1427
    %v1429 = vsub.s32 %v1428, 2
    %vm1430 = vcmp.gt.s32.totalorder 0, %v1429
    %v1431 = vsel %vm1430, 0, %v1429
    %v1432 = vsub.s32 32, %v1431
    %v1433 = vshll.u32 %v1424, %v1431
    %v1434 = vshrl.u32 %v1416, %v1432
    %v1435 = vor.u32 %v1433, %v1434
    %v1436 = vsub.s32 4294967266, %v1431
    %v1437 = vadd.s32 %v1436, 127
    %v1438 = vshll.u32 %v1437, 23
    %v1439 = vor.u32 4788187, %v1438
    %v1440 = vand.u32 2147483647, %v1439
    %v1442 = vcvt.s32.f32 %v1435
    %v1443 = vmul.f32 %v1442, %v1440
    %v1444 = vxor.u32 %v1443, 2147483648
    %v1445 = vsel %vm1362, %v1444, %v1443
    %v1446 = vsub.s32 4, %v1422
    %v1447 = vsel %vm1362, %v1446, %v1422
    %v1448 = vsel %vm1361, %v1223, %v1445
    %v1449 = vsel %vm1361, 0, %v1447
    %v1450 = vcosq.f32.pop %v1448
    %v1451 = vsinq.f32.pop %v1448
    %vm1452 = vweird.f32 %v1223
    %v1453 = vadd.s32 %v1449, 3
    %v1454 = vand.u32 %v1453, 3
    %vm1455 = vcmp.lt.s32.totalorder %v1454, 2
    %vm1456 = vcmp.eq.s32.totalorder %v1454, 0
    %v1457 = vxor.u32 %v1451, 2147483648
    %v1458 = vsel %vm1456, %v1450, %v1457
    %vm1459 = vcmp.eq.s32.totalorder %v1454, 2
    %v1460 = vxor.u32 %v1450, 2147483648
    %v1461 = vsel %vm1459, %v1460, %v1451
    %v1462 = vsel %vm1455, %v1458, %v1461
    %v1463 = vsel %vm1452, nan, %v1462
    %v1464 = vand.u32 2147483647, %v1228
    %vm1465 = vcmp.le.f32.partialorder %v1464, 0.7853982
    %vm1466 = vcmp.lt.s32.totalorder %v1228, 0
    %v1467 = vand.u32 %v1228, 2139095040
    %v1468 = vshrl.u32 %v1467, 23
    %v1469 = vsub.s32 %v1468, 127
    %v1470 = vand.u32 2147483647, %v1228
    %v1471 = vand.u32 %v1470, 8388607
    %v1472 = vor.u32 %v1471, 8388608
    %v1473 = vsub.s32 0, %v1472
    %v1474 = vadd.s32 %v1469, 1
    %vm1475 = vcmp.gt.s32.totalorder %v1474, 0
    %v1476 = vsel %vm1475, %v1474, 0
    %v1477 = vshrl.u32 %v1476, 5
    %v1478 = vand.u32 %v1476, 31
    %v1479 = vsub.s32 32, %v1478
    %v1480 = vshrl.u32 683565275, %v1479
    %v1481 = vshll.u32 683565275, %v1478
    %v1482 = vshrl.u32 2475754826, %v1479
    %v1483 = vor.u32 %v1481, %v1482
    %v1484 = vshll.u32 2475754826, %v1478
    %v1485 = vshrl.u32 2131351028, %v1479
    %v1486 = vor.u32 %v1484, %v1485
    %v1487 = vshll.u32 2131351028, %v1478
    %v1488 = vshrl.u32 2102212464, %v1479
    %v1489 = vor.u32 %v1487, %v1488
    %v1490 = vshll.u32 2102212464, %v1478
    %v1491 = vshrl.u32 920167782, %v1479
    %v1492 = vor.u32 %v1490, %v1491
    %v1493 = vshll.u32 920167782, %v1478
    %v1494 = vshrl.u32 1326507024, %v1479
    %v1495 = vor.u32 %v1493, %v1494
    %vm1496 = vcmp.lt.s32.totalorder %v1477, 1
    %vm1497 = vcmp.lt.s32.totalorder %v1477, 2
    %vm1498 = vcmp.lt.s32.totalorder %v1477, 3
    %vm1499 = vcmp.lt.s32.totalorder %v1477, 4
    %v1500 = vsel %vm1496, %v1480, %v1483
    %v1501 = vsel %vm1499, %v1489, 2102212464
    %v1502 = vsel %vm1498, %v1486, %v1501
    %v1503 = vsel %vm1497, %v1500, %v1502
    %v1504 = vsel %vm1496, %v1483, %v1486
    %v1505 = vsel %vm1499, %v1492, 920167782
    %v1506 = vsel %vm1498, %v1489, %v1505
    %v1507 = vsel %vm1497, %v1504, %v1506
    %v1508 = vsel %vm1496, %v1486, %v1489
    %v1509 = vsel %vm1499, %v1495, 1326507024
    %v1510 = vsel %vm1498, %v1492, %v1509
    %v1511 = vsel %vm1497, %v1508, %v1510
    %v1512 = vshll.u32 %v1472, 8
    %v1513 = vmul.u32.u64.compose %v1512, %v1511
    %v1514 = vextract.low.u32 %v1513
    %v1515 = vextract.high.u32 %v1513
    %v1516 = vmul.u32.u64.compose %v1512, %v1507
    %v1517 = vextract.low.u32 %v1516
    %v1518 = vextract.high.u32 %v1516
    %v1519 = vmul.u32 %v1512, %v1503
    %v1520 = vadd.s32 %v1515, %v1517
    %vm1521 = vc.u32 %v1515, %v1517
    %v1522 = vadd.s32 %v1518, 1
    %v1523 = vsel %vm1521, %v1522, %v1518
    %v1524 = vadd.s32 %v1519, %v1523
    %v1525 = vadd.s32 %v1524, 536870912
    %v1526 = vshrl.u32 %v1525, 30
    %v1527 = vshll.u32 %v1526, 30
    %v1528 = vsub.s32 %v1524, %v1527
    %vm1529 = vcmp.lt.s32.totalorder %v1528, 0
    %v1530 = vsub.s32 0, %v1528
    %v1531 = vsel %vm1529, %v1530, %v1528
    %v1532 = vclz %v1531
    %v1533 = vsub.s32 %v1532, 2
    %vm1534 = vcmp.gt.s32.totalorder 0, %v1533
    %v1535 = vsel %vm1534, 0, %v1533
    %v1536 = vsub.s32 32, %v1535
    %v1537 = vshll.u32 %v1528, %v1535
    %v1538 = vshrl.u32 %v1520, %v1536
    %v1539 = vor.u32 %v1537, %v1538
    %v1540 = vsub.s32 4294967266, %v1535
    %v1541 = vadd.s32 %v1540, 127
    %v1542 = vshll.u32 %v1541, 23
    %v1543 = vor.u32 4788187, %v1542
    %v1544 = vand.u32 2147483647, %v1543
    %v1546 = vcvt.s32.f32 %v1539
    %v1547 = vmul.f32 %v1546, %v1544
    %v1548 = vxor.u32 %v1547, 2147483648
    %v1549 = vsel %vm1466, %v1548, %v1547
    %v1550 = vsub.s32 4, %v1526
    %v1551 = vsel %vm1466, %v1550, %v1526
    %v1552 = vsel %vm1465, %v1228, %v1549
    %v1553 = vsel %vm1465, 0, %v1551
    %v1554 = vcosq.f32.pop %v1552
    %v1555 = vsinq.f32.pop %v1552
    %vm1556 = vweird.f32 %v1228
    %v1557 = vadd.s32 %v1553, 3
    %v1558 = vand.u32 %v1557, 3
    %vm1559 = vcmp.lt.s32.totalorder %v1558, 2
    %vm1560 = vcmp.eq.s32.totalorder %v1558, 0
    %v1561 = vxor.u32 %v1555, 2147483648
    %v1562 = vsel %vm1560, %v1554, %v1561
    %vm1563 = vcmp.eq.s32.totalorder %v1558, 2
    %v1564 = vxor.u32 %v1554, 2147483648
    %v1565 = vsel %vm1563, %v1564, %v1555
    %v1566 = vsel %vm1559, %v1562, %v1565
    %v1567 = vsel %vm1556, nan, %v1566
    %v1568 = vand.u32 2147483647, %v1233
    %vm1569 = vcmp.le.f32.partialorder %v1568, 0.7853982
    %vm1570 = vcmp.lt.s32.totalorder %v1233, 0
    %v1571 = vand.u32 %v1233, 2139095040
    %v1572 = vshrl.u32 %v1571, 23
    %v1573 = vsub.s32 %v1572, 127
    %v1574 = vand.u32 2147483647, %v1233
    %v1575 = vand.u32 %v1574, 8388607
    %v1576 = vor.u32 %v1575, 8388608
    %v1577 = vsub.s32 0, %v1576
    %v1578 = vadd.s32 %v1573, 1
    %vm1579 = vcmp.gt.s32.totalorder %v1578, 0
    %v1580 = vsel %vm1579, %v1578, 0
    %v1581 = vshrl.u32 %v1580, 5
    %v1582 = vand.u32 %v1580, 31
    %v1583 = vsub.s32 32, %v1582
    %v1584 = vshrl.u32 683565275, %v1583
    %v1585 = vshll.u32 683565275, %v1582
    %v1586 = vshrl.u32 2475754826, %v1583
    %v1587 = vor.u32 %v1585, %v1586
    %v1588 = vshll.u32 2475754826, %v1582
    %v1589 = vshrl.u32 2131351028, %v1583
    %v1590 = vor.u32 %v1588, %v1589
    %v1591 = vshll.u32 2131351028, %v1582
    %v1592 = vshrl.u32 2102212464, %v1583
    %v1593 = vor.u32 %v1591, %v1592
    %v1594 = vshll.u32 2102212464, %v1582
    %v1595 = vshrl.u32 920167782, %v1583
    %v1596 = vor.u32 %v1594, %v1595
    %v1597 = vshll.u32 920167782, %v1582
    %v1598 = vshrl.u32 1326507024, %v1583
    %v1599 = vor.u32 %v1597, %v1598
    %vm1600 = vcmp.lt.s32.totalorder %v1581, 1
    %vm1601 = vcmp.lt.s32.totalorder %v1581, 2
    %vm1602 = vcmp.lt.s32.totalorder %v1581, 3
    %vm1603 = vcmp.lt.s32.totalorder %v1581, 4
    %v1604 = vsel %vm1600, %v1584, %v1587
    %v1605 = vsel %vm1603, %v1593, 2102212464
    %v1606 = vsel %vm1602, %v1590, %v1605
    %v1607 = vsel %vm1601, %v1604, %v1606
    %v1608 = vsel %vm1600, %v1587, %v1590
    %v1609 = vsel %vm1603, %v1596, 920167782
    %v1610 = vsel %vm1602, %v1593, %v1609
    %v1611 = vsel %vm1601, %v1608, %v1610
    %v1612 = vsel %vm1600, %v1590, %v1593
    %v1613 = vsel %vm1603, %v1599, 1326507024
    %v1614 = vsel %vm1602, %v1596, %v1613
    %v1615 = vsel %vm1601, %v1612, %v1614
    %v1616 = vshll.u32 %v1576, 8
    %v1617 = vmul.u32.u64.compose %v1616, %v1615
    %v1618 = vextract.low.u32 %v1617
    %v1619 = vextract.high.u32 %v1617
    %v1620 = vmul.u32.u64.compose %v1616, %v1611
    %v1621 = vextract.low.u32 %v1620
    %v1622 = vextract.high.u32 %v1620
    %v1623 = vmul.u32 %v1616, %v1607
    %v1624 = vadd.s32 %v1619, %v1621
    %vm1625 = vc.u32 %v1619, %v1621
    %v1626 = vadd.s32 %v1622, 1
    %v1627 = vsel %vm1625, %v1626, %v1622
    %v1628 = vadd.s32 %v1623, %v1627
    %v1629 = vadd.s32 %v1628, 536870912
    %v1630 = vshrl.u32 %v1629, 30
    %v1631 = vshll.u32 %v1630, 30
    %v1632 = vsub.s32 %v1628, %v1631
    %vm1633 = vcmp.lt.s32.totalorder %v1632, 0
    %v1634 = vsub.s32 0, %v1632
    %v1635 = vsel %vm1633, %v1634, %v1632
    %v1636 = vclz %v1635
    %v1637 = vsub.s32 %v1636, 2
    %vm1638 = vcmp.gt.s32.totalorder 0, %v1637
    %v1639 = vsel %vm1638, 0, %v1637
    %v1640 = vsub.s32 32, %v1639
    %v1641 = vshll.u32 %v1632, %v1639
    %v1642 = vshrl.u32 %v1624, %v1640
    %v1643 = vor.u32 %v1641, %v1642
    %v1644 = vsub.s32 4294967266, %v1639
    %v1645 = vadd.s32 %v1644, 127
    %v1646 = vshll.u32 %v1645, 23
    %v1647 = vor.u32 4788187, %v1646
    %v1648 = vand.u32 2147483647, %v1647
    %v1650 = vcvt.s32.f32 %v1643
    %v1651 = vmul.f32 %v1650, %v1648
    %v1652 = vxor.u32 %v1651, 2147483648
    %v1653 = vsel %vm1570, %v1652, %v1651
    %v1654 = vsub.s32 4, %v1630
    %v1655 = vsel %vm1570, %v1654, %v1630
    %v1656 = vsel %vm1569, %v1233, %v1653
    %v1657 = vsel %vm1569, 0, %v1655
    %v1658 = vcosq.f32.pop %v1656
    %v1659 = vsinq.f32.pop %v1656
    %vm1660 = vweird.f32 %v1233
    %v1661 = vadd.s32 %v1657, 3
    %v1662 = vand.u32 %v1661, 3
    %vm1663 = vcmp.lt.s32.totalorder %v1662, 2
    %vm1664 = vcmp.eq.s32.totalorder %v1662, 0
    %v1665 = vxor.u32 %v1659, 2147483648
    %v1666 = vsel %vm1664, %v1658, %v1665
    %vm1667 = vcmp.eq.s32.totalorder %v1662, 2
    %v1668 = vxor.u32 %v1658, 2147483648
    %v1669 = vsel %vm1667, %v1668, %v1659
    %v1670 = vsel %vm1663, %v1666, %v1669
    %v1671 = vsel %vm1660, nan, %v1670
    %v1672 = vand.u32 2147483647, %v1238
    %vm1673 = vcmp.le.f32.partialorder %v1672, 0.7853982
    %vm1674 = vcmp.lt.s32.totalorder %v1238, 0
    %v1675 = vand.u32 %v1238, 2139095040
    %v1676 = vshrl.u32 %v1675, 23
    %v1677 = vsub.s32 %v1676, 127
    %v1678 = vand.u32 2147483647, %v1238
    %v1679 = vand.u32 %v1678, 8388607
    %v1680 = vor.u32 %v1679, 8388608
    %v1681 = vsub.s32 0, %v1680
    %v1682 = vadd.s32 %v1677, 1
    %vm1683 = vcmp.gt.s32.totalorder %v1682, 0
    %v1684 = vsel %vm1683, %v1682, 0
    %v1685 = vshrl.u32 %v1684, 5
    %v1686 = vand.u32 %v1684, 31
    %v1687 = vsub.s32 32, %v1686
    %v1688 = vshrl.u32 683565275, %v1687
    %v1689 = vshll.u32 683565275, %v1686
    %v1690 = vshrl.u32 2475754826, %v1687
    %v1691 = vor.u32 %v1689, %v1690
    %v1692 = vshll.u32 2475754826, %v1686
    %v1693 = vshrl.u32 2131351028, %v1687
    %v1694 = vor.u32 %v1692, %v1693
    %v1695 = vshll.u32 2131351028, %v1686
    %v1696 = vshrl.u32 2102212464, %v1687
    %v1697 = vor.u32 %v1695, %v1696
    %v1698 = vshll.u32 2102212464, %v1686
    %v1699 = vshrl.u32 920167782, %v1687
    %v1700 = vor.u32 %v1698, %v1699
    %v1701 = vshll.u32 920167782, %v1686
    %v1702 = vshrl.u32 1326507024, %v1687
    %v1703 = vor.u32 %v1701, %v1702
    %vm1704 = vcmp.lt.s32.totalorder %v1685, 1
    %vm1705 = vcmp.lt.s32.totalorder %v1685, 2
    %vm1706 = vcmp.lt.s32.totalorder %v1685, 3
    %vm1707 = vcmp.lt.s32.totalorder %v1685, 4
    %v1708 = vsel %vm1704, %v1688, %v1691
    %v1709 = vsel %vm1707, %v1697, 2102212464
    %v1710 = vsel %vm1706, %v1694, %v1709
    %v1711 = vsel %vm1705, %v1708, %v1710
    %v1712 = vsel %vm1704, %v1691, %v1694
    %v1713 = vsel %vm1707, %v1700, 920167782
    %v1714 = vsel %vm1706, %v1697, %v1713
    %v1715 = vsel %vm1705, %v1712, %v1714
    %v1716 = vsel %vm1704, %v1694, %v1697
    %v1717 = vsel %vm1707, %v1703, 1326507024
    %v1718 = vsel %vm1706, %v1700, %v1717
    %v1719 = vsel %vm1705, %v1716, %v1718
    %v1720 = vshll.u32 %v1680, 8
    %v1721 = vmul.u32.u64.compose %v1720, %v1719
    %v1722 = vextract.low.u32 %v1721
    %v1723 = vextract.high.u32 %v1721
    %v1724 = vmul.u32.u64.compose %v1720, %v1715
    %v1725 = vextract.low.u32 %v1724
    %v1726 = vextract.high.u32 %v1724
    %v1727 = vmul.u32 %v1720, %v1711
    %v1728 = vadd.s32 %v1723, %v1725
    %vm1729 = vc.u32 %v1723, %v1725
    %v1730 = vadd.s32 %v1726, 1
    %v1731 = vsel %vm1729, %v1730, %v1726
    %v1732 = vadd.s32 %v1727, %v1731
    %v1733 = vadd.s32 %v1732, 536870912
    %v1734 = vshrl.u32 %v1733, 30
    %v1735 = vshll.u32 %v1734, 30
    %v1736 = vsub.s32 %v1732, %v1735
    %vm1737 = vcmp.lt.s32.totalorder %v1736, 0
    %v1738 = vsub.s32 0, %v1736
    %v1739 = vsel %vm1737, %v1738, %v1736
    %v1740 = vclz %v1739
    %v1741 = vsub.s32 %v1740, 2
    %vm1742 = vcmp.gt.s32.totalorder 0, %v1741
    %v1743 = vsel %vm1742, 0, %v1741
    %v1744 = vsub.s32 32, %v1743
    %v1745 = vshll.u32 %v1736, %v1743
    %v1746 = vshrl.u32 %v1728, %v1744
    %v1747 = vor.u32 %v1745, %v1746
    %v1748 = vsub.s32 4294967266, %v1743
    %v1749 = vadd.s32 %v1748, 127
    %v1750 = vshll.u32 %v1749, 23
    %v1751 = vor.u32 4788187, %v1750
    %v1752 = vand.u32 2147483647, %v1751
    %v1754 = vcvt.s32.f32 %v1747
    %v1755 = vmul.f32 %v1754, %v1752
    %v1756 = vxor.u32 %v1755, 2147483648
    %v1757 = vsel %vm1674, %v1756, %v1755
    %v1758 = vsub.s32 4, %v1734
    %v1759 = vsel %vm1674, %v1758, %v1734
    %v1760 = vsel %vm1673, %v1238, %v1757
    %v1761 = vsel %vm1673, 0, %v1759
    %v1762 = vcosq.f32.pop %v1760
    %v1763 = vsinq.f32.pop %v1760
    %vm1764 = vweird.f32 %v1238
    %v1765 = vadd.s32 %v1761, 3
    %v1766 = vand.u32 %v1765, 3
    %vm1767 = vcmp.lt.s32.totalorder %v1766, 2
    %vm1768 = vcmp.eq.s32.totalorder %v1766, 0
    %v1769 = vxor.u32 %v1763, 2147483648
    %v1770 = vsel %vm1768, %v1762, %v1769
    %vm1771 = vcmp.eq.s32.totalorder %v1766, 2
    %v1772 = vxor.u32 %v1762, 2147483648
    %v1773 = vsel %vm1771, %v1772, %v1763
    %v1774 = vsel %vm1767, %v1770, %v1773
    %v1775 = vsel %vm1764, nan, %v1774
    %v1776 = vand.u32 2147483647, %v1243
    %vm1777 = vcmp.le.f32.partialorder %v1776, 0.7853982
    %vm1778 = vcmp.lt.s32.totalorder %v1243, 0
    %v1779 = vand.u32 %v1243, 2139095040
    %v1780 = vshrl.u32 %v1779, 23
    %v1781 = vsub.s32 %v1780, 127
    %v1782 = vand.u32 2147483647, %v1243
    %v1783 = vand.u32 %v1782, 8388607
    %v1784 = vor.u32 %v1783, 8388608
    %v1785 = vsub.s32 0, %v1784
    %v1786 = vadd.s32 %v1781, 1
    %vm1787 = vcmp.gt.s32.totalorder %v1786, 0
    %v1788 = vsel %vm1787, %v1786, 0
    %v1789 = vshrl.u32 %v1788, 5
    %v1790 = vand.u32 %v1788, 31
    %v1791 = vsub.s32 32, %v1790
    %v1792 = vshrl.u32 683565275, %v1791
    %v1793 = vshll.u32 683565275, %v1790
    %v1794 = vshrl.u32 2475754826, %v1791
    %v1795 = vor.u32 %v1793, %v1794
    %v1796 = vshll.u32 2475754826, %v1790
    %v1797 = vshrl.u32 2131351028, %v1791
    %v1798 = vor.u32 %v1796, %v1797
    %v1799 = vshll.u32 2131351028, %v1790
    %v1800 = vshrl.u32 2102212464, %v1791
    %v1801 = vor.u32 %v1799, %v1800
    %v1802 = vshll.u32 2102212464, %v1790
    %v1803 = vshrl.u32 920167782, %v1791
    %v1804 = vor.u32 %v1802, %v1803
    %v1805 = vshll.u32 920167782, %v1790
    %v1806 = vshrl.u32 1326507024, %v1791
    %v1807 = vor.u32 %v1805, %v1806
    %vm1808 = vcmp.lt.s32.totalorder %v1789, 1
    %vm1809 = vcmp.lt.s32.totalorder %v1789, 2
    %vm1810 = vcmp.lt.s32.totalorder %v1789, 3
    %vm1811 = vcmp.lt.s32.totalorder %v1789, 4
    %v1812 = vsel %vm1808, %v1792, %v1795
    %v1813 = vsel %vm1811, %v1801, 2102212464
    %v1814 = vsel %vm1810, %v1798, %v1813
    %v1815 = vsel %vm1809, %v1812, %v1814
    %v1816 = vsel %vm1808, %v1795, %v1798
    %v1817 = vsel %vm1811, %v1804, 920167782
    %v1818 = vsel %vm1810, %v1801, %v1817
    %v1819 = vsel %vm1809, %v1816, %v1818
    %v1820 = vsel %vm1808, %v1798, %v1801
    %v1821 = vsel %vm1811, %v1807, 1326507024
    %v1822 = vsel %vm1810, %v1804, %v1821
    %v1823 = vsel %vm1809, %v1820, %v1822
    %v1824 = vshll.u32 %v1784, 8
    %v1825 = vmul.u32.u64.compose %v1824, %v1823
    %v1826 = vextract.low.u32 %v1825
    %v1827 = vextract.high.u32 %v1825
    %v1828 = vmul.u32.u64.compose %v1824, %v1819
    %v1829 = vextract.low.u32 %v1828
    %v1830 = vextract.high.u32 %v1828
    %v1831 = vmul.u32 %v1824, %v1815
    %v1832 = vadd.s32 %v1827, %v1829
    %vm1833 = vc.u32 %v1827, %v1829
    %v1834 = vadd.s32 %v1830, 1
    %v1835 = vsel %vm1833, %v1834, %v1830
    %v1836 = vadd.s32 %v1831, %v1835
    %v1837 = vadd.s32 %v1836, 536870912
    %v1838 = vshrl.u32 %v1837, 30
    %v1839 = vshll.u32 %v1838, 30
    %v1840 = vsub.s32 %v1836, %v1839
    %vm1841 = vcmp.lt.s32.totalorder %v1840, 0
    %v1842 = vsub.s32 0, %v1840
    %v1843 = vsel %vm1841, %v1842, %v1840
    %v1844 = vclz %v1843
    %v1845 = vsub.s32 %v1844, 2
    %vm1846 = vcmp.gt.s32.totalorder 0, %v1845
    %v1847 = vsel %vm1846, 0, %v1845
    %v1848 = vsub.s32 32, %v1847
    %v1849 = vshll.u32 %v1840, %v1847
    %v1850 = vshrl.u32 %v1832, %v1848
    %v1851 = vor.u32 %v1849, %v1850
    %v1852 = vsub.s32 4294967266, %v1847
    %v1853 = vadd.s32 %v1852, 127
    %v1854 = vshll.u32 %v1853, 23
    %v1855 = vor.u32 4788187, %v1854
    %v1856 = vand.u32 2147483647, %v1855
    %v1858 = vcvt.s32.f32 %v1851
    %v1859 = vmul.f32 %v1858, %v1856
    %v1860 = vxor.u32 %v1859, 2147483648
    %v1861 = vsel %vm1778, %v1860, %v1859
    %v1862 = vsub.s32 4, %v1838
    %v1863 = vsel %vm1778, %v1862, %v1838
    %v1864 = vsel %vm1777, %v1243, %v1861
    %v1865 = vsel %vm1777, 0, %v1863
    %v1866 = vcosq.f32.pop %v1864
    %v1867 = vsinq.f32.pop %v1864
    %vm1868 = vweird.f32 %v1243
    %v1869 = vadd.s32 %v1865, 3
    %v1870 = vand.u32 %v1869, 3
    %vm1871 = vcmp.lt.s32.totalorder %v1870, 2
    %vm1872 = vcmp.eq.s32.totalorder %v1870, 0
    %v1873 = vxor.u32 %v1867, 2147483648
    %v1874 = vsel %vm1872, %v1866, %v1873
    %vm1875 = vcmp.eq.s32.totalorder %v1870, 2
    %v1876 = vxor.u32 %v1866, 2147483648
    %v1877 = vsel %vm1875, %v1876, %v1867
    %v1878 = vsel %vm1871, %v1874, %v1877
    %v1879 = vsel %vm1868, nan, %v1878
    %v1880 = vand.u32 2147483647, %v1248
    %vm1881 = vcmp.le.f32.partialorder %v1880, 0.7853982
    %vm1882 = vcmp.lt.s32.totalorder %v1248, 0
    %v1883 = vand.u32 %v1248, 2139095040
    %v1884 = vshrl.u32 %v1883, 23
    %v1885 = vsub.s32 %v1884, 127
    %v1886 = vand.u32 2147483647, %v1248
    %v1887 = vand.u32 %v1886, 8388607
    %v1888 = vor.u32 %v1887, 8388608
    %v1889 = vsub.s32 0, %v1888
    %v1890 = vadd.s32 %v1885, 1
    %vm1891 = vcmp.gt.s32.totalorder %v1890, 0
    %v1892 = vsel %vm1891, %v1890, 0
    %v1893 = vshrl.u32 %v1892, 5
    %v1894 = vand.u32 %v1892, 31
    %v1895 = vsub.s32 32, %v1894
    %v1896 = vshrl.u32 683565275, %v1895
    %v1897 = vshll.u32 683565275, %v1894
    %v1898 = vshrl.u32 2475754826, %v1895
    %v1899 = vor.u32 %v1897, %v1898
    %v1900 = vshll.u32 2475754826, %v1894
    %v1901 = vshrl.u32 2131351028, %v1895
    %v1902 = vor.u32 %v1900, %v1901
    %v1903 = vshll.u32 2131351028, %v1894
    %v1904 = vshrl.u32 2102212464, %v1895
    %v1905 = vor.u32 %v1903, %v1904
    %v1906 = vshll.u32 2102212464, %v1894
    %v1907 = vshrl.u32 920167782, %v1895
    %v1908 = vor.u32 %v1906, %v1907
    %v1909 = vshll.u32 920167782, %v1894
    %v1910 = vshrl.u32 1326507024, %v1895
    %v1911 = vor.u32 %v1909, %v1910
    %vm1912 = vcmp.lt.s32.totalorder %v1893, 1
    %vm1913 = vcmp.lt.s32.totalorder %v1893, 2
    %vm1914 = vcmp.lt.s32.totalorder %v1893, 3
    %vm1915 = vcmp.lt.s32.totalorder %v1893, 4
    %v1916 = vsel %vm1912, %v1896, %v1899
    %v1917 = vsel %vm1915, %v1905, 2102212464
    %v1918 = vsel %vm1914, %v1902, %v1917
    %v1919 = vsel %vm1913, %v1916, %v1918
    %v1920 = vsel %vm1912, %v1899, %v1902
    %v1921 = vsel %vm1915, %v1908, 920167782
    %v1922 = vsel %vm1914, %v1905, %v1921
    %v1923 = vsel %vm1913, %v1920, %v1922
    %v1924 = vsel %vm1912, %v1902, %v1905
    %v1925 = vsel %vm1915, %v1911, 1326507024
    %v1926 = vsel %vm1914, %v1908, %v1925
    %v1927 = vsel %vm1913, %v1924, %v1926
    %v1928 = vshll.u32 %v1888, 8
    %v1929 = vmul.u32.u64.compose %v1928, %v1927
    %v1930 = vextract.low.u32 %v1929
    %v1931 = vextract.high.u32 %v1929
    %v1932 = vmul.u32.u64.compose %v1928, %v1923
    %v1933 = vextract.low.u32 %v1932
    %v1934 = vextract.high.u32 %v1932
    %v1935 = vmul.u32 %v1928, %v1919
    %v1936 = vadd.s32 %v1931, %v1933
    %vm1937 = vc.u32 %v1931, %v1933
    %v1938 = vadd.s32 %v1934, 1
    %v1939 = vsel %vm1937, %v1938, %v1934
    %v1940 = vadd.s32 %v1935, %v1939
    %v1941 = vadd.s32 %v1940, 536870912
    %v1942 = vshrl.u32 %v1941, 30
    %v1943 = vshll.u32 %v1942, 30
    %v1944 = vsub.s32 %v1940, %v1943
    %vm1945 = vcmp.lt.s32.totalorder %v1944, 0
    %v1946 = vsub.s32 0, %v1944
    %v1947 = vsel %vm1945, %v1946, %v1944
    %v1948 = vclz %v1947
    %v1949 = vsub.s32 %v1948, 2
    %vm1950 = vcmp.gt.s32.totalorder 0, %v1949
    %v1951 = vsel %vm1950, 0, %v1949
    %v1952 = vsub.s32 32, %v1951
    %v1953 = vshll.u32 %v1944, %v1951
    %v1954 = vshrl.u32 %v1936, %v1952
    %v1955 = vor.u32 %v1953, %v1954
    %v1956 = vsub.s32 4294967266, %v1951
    %v1957 = vadd.s32 %v1956, 127
    %v1958 = vshll.u32 %v1957, 23
    %v1959 = vor.u32 4788187, %v1958
    %v1960 = vand.u32 2147483647, %v1959
    %v1962 = vcvt.s32.f32 %v1955
    %v1963 = vmul.f32 %v1962, %v1960
    %v1964 = vxor.u32 %v1963, 2147483648
    %v1965 = vsel %vm1882, %v1964, %v1963
    %v1966 = vsub.s32 4, %v1942
    %v1967 = vsel %vm1882, %v1966, %v1942
    %v1968 = vsel %vm1881, %v1248, %v1965
    %v1969 = vsel %vm1881, 0, %v1967
    %v1970 = vcosq.f32.pop %v1968
    %v1971 = vsinq.f32.pop %v1968
    %vm1972 = vweird.f32 %v1248
    %v1973 = vadd.s32 %v1969, 3
    %v1974 = vand.u32 %v1973, 3
    %vm1975 = vcmp.lt.s32.totalorder %v1974, 2
    %vm1976 = vcmp.eq.s32.totalorder %v1974, 0
    %v1977 = vxor.u32 %v1971, 2147483648
    %v1978 = vsel %vm1976, %v1970, %v1977
    %vm1979 = vcmp.eq.s32.totalorder %v1974, 2
    %v1980 = vxor.u32 %v1970, 2147483648
    %v1981 = vsel %vm1979, %v1980, %v1971
    %v1982 = vsel %vm1975, %v1978, %v1981
    %v1983 = vsel %vm1972, nan, %v1982
    %v1984 = vand.u32 2147483647, %v1253
    %vm1985 = vcmp.le.f32.partialorder %v1984, 0.7853982
    %vm1986 = vcmp.lt.s32.totalorder %v1253, 0
    %v1987 = vand.u32 %v1253, 2139095040
    %v1988 = vshrl.u32 %v1987, 23
    %v1989 = vsub.s32 %v1988, 127
    %v1990 = vand.u32 2147483647, %v1253
    %v1991 = vand.u32 %v1990, 8388607
    %v1992 = vor.u32 %v1991, 8388608
    %v1993 = vsub.s32 0, %v1992
    %v1994 = vadd.s32 %v1989, 1
    %vm1995 = vcmp.gt.s32.totalorder %v1994, 0
    %v1996 = vsel %vm1995, %v1994, 0
    %v1997 = vshrl.u32 %v1996, 5
    %v1998 = vand.u32 %v1996, 31
    %v1999 = vsub.s32 32, %v1998
    %v2000 = vshrl.u32 683565275, %v1999
    %v2001 = vshll.u32 683565275, %v1998
    %v2002 = vshrl.u32 2475754826, %v1999
    %v2003 = vor.u32 %v2001, %v2002
    %v2004 = vshll.u32 2475754826, %v1998
    %v2005 = vshrl.u32 2131351028, %v1999
    %v2006 = vor.u32 %v2004, %v2005
    %v2007 = vshll.u32 2131351028, %v1998
    %v2008 = vshrl.u32 2102212464, %v1999
    %v2009 = vor.u32 %v2007, %v2008
    %v2010 = vshll.u32 2102212464, %v1998
    %v2011 = vshrl.u32 920167782, %v1999
    %v2012 = vor.u32 %v2010, %v2011
    %v2013 = vshll.u32 920167782, %v1998
    %v2014 = vshrl.u32 1326507024, %v1999
    %v2015 = vor.u32 %v2013, %v2014
    %vm2016 = vcmp.lt.s32.totalorder %v1997, 1
    %vm2017 = vcmp.lt.s32.totalorder %v1997, 2
    %vm2018 = vcmp.lt.s32.totalorder %v1997, 3
    %vm2019 = vcmp.lt.s32.totalorder %v1997, 4
    %v2020 = vsel %vm2016, %v2000, %v2003
    %v2021 = vsel %vm2019, %v2009, 2102212464
    %v2022 = vsel %vm2018, %v2006, %v2021
    %v2023 = vsel %vm2017, %v2020, %v2022
    %v2024 = vsel %vm2016, %v2003, %v2006
    %v2025 = vsel %vm2019, %v2012, 920167782
    %v2026 = vsel %vm2018, %v2009, %v2025
    %v2027 = vsel %vm2017, %v2024, %v2026
    %v2028 = vsel %vm2016, %v2006, %v2009
    %v2029 = vsel %vm2019, %v2015, 1326507024
    %v2030 = vsel %vm2018, %v2012, %v2029
    %v2031 = vsel %vm2017, %v2028, %v2030
    %v2032 = vshll.u32 %v1992, 8
    %v2033 = vmul.u32.u64.compose %v2032, %v2031
    %v2034 = vextract.low.u32 %v2033
    %v2035 = vextract.high.u32 %v2033
    %v2036 = vmul.u32.u64.compose %v2032, %v2027
    %v2037 = vextract.low.u32 %v2036
    %v2038 = vextract.high.u32 %v2036
    %v2039 = vmul.u32 %v2032, %v2023
    %v2040 = vadd.s32 %v2035, %v2037
    %vm2041 = vc.u32 %v2035, %v2037
    %v2042 = vadd.s32 %v2038, 1
    %v2043 = vsel %vm2041, %v2042, %v2038
    %v2044 = vadd.s32 %v2039, %v2043
    %v2045 = vadd.s32 %v2044, 536870912
    %v2046 = vshrl.u32 %v2045, 30
    %v2047 = vshll.u32 %v2046, 30
    %v2048 = vsub.s32 %v2044, %v2047
    %vm2049 = vcmp.lt.s32.totalorder %v2048, 0
    %v2050 = vsub.s32 0, %v2048
    %v2051 = vsel %vm2049, %v2050, %v2048
    %v2052 = vclz %v2051
    %v2053 = vsub.s32 %v2052, 2
    %vm2054 = vcmp.gt.s32.totalorder 0, %v2053
    %v2055 = vsel %vm2054, 0, %v2053
    %v2056 = vsub.s32 32, %v2055
    %v2057 = vshll.u32 %v2048, %v2055
    %v2058 = vshrl.u32 %v2040, %v2056
    %v2059 = vor.u32 %v2057, %v2058
    %v2060 = vsub.s32 4294967266, %v2055
    %v2061 = vadd.s32 %v2060, 127
    %v2062 = vshll.u32 %v2061, 23
    %v2063 = vor.u32 4788187, %v2062
    %v2064 = vand.u32 2147483647, %v2063
    %v2066 = vcvt.s32.f32 %v2059
    %v2067 = vmul.f32 %v2066, %v2064
    %v2068 = vxor.u32 %v2067, 2147483648
    %v2069 = vsel %vm1986, %v2068, %v2067
    %v2070 = vsub.s32 4, %v2046
    %v2071 = vsel %vm1986, %v2070, %v2046
    %v2072 = vsel %vm1985, %v1253, %v2069
    %v2073 = vsel %vm1985, 0, %v2071
    %v2074 = vcosq.f32.pop %v2072
    %v2075 = vsinq.f32.pop %v2072
    %vm2076 = vweird.f32 %v1253
    %v2077 = vadd.s32 %v2073, 3
    %v2078 = vand.u32 %v2077, 3
    %vm2079 = vcmp.lt.s32.totalorder %v2078, 2
    %vm2080 = vcmp.eq.s32.totalorder %v2078, 0
    %v2081 = vxor.u32 %v2075, 2147483648
    %v2082 = vsel %vm2080, %v2074, %v2081
    %vm2083 = vcmp.eq.s32.totalorder %v2078, 2
    %v2084 = vxor.u32 %v2074, 2147483648
    %v2085 = vsel %vm2083, %v2084, %v2075
    %v2086 = vsel %vm2079, %v2082, %v2085
    %v2087 = vsel %vm2076, nan, %v2086
    %v2088 = vadd.f32 %v1359, %v49
    %v2089 = vadd.f32 %v1463, %v50
    %v2090 = vadd.f32 %v1567, %v51
    %v2091 = vadd.f32 %v1671, %v52
    %v2092 = vadd.f32 %v1775, %v45
    %v2093 = vadd.f32 %v1879, %v46
    %v2094 = vadd.f32 %v1983, %v47
    %v2095 = vadd.f32 %v2087, %v48
    %v2096 = vmul.f32 %v2088, 0.5
    %v2097 = vmul.f32 %v2089, 0.5
    %v2098 = vmul.f32 %v2090, 0.5
    %v2099 = vmul.f32 %v2091, 0.5
    %v2100 = vmul.f32 %v2092, 0.5
    %v2101 = vmul.f32 %v2093, 0.5
    %v2102 = vmul.f32 %v2094, 0.5
    %v2103 = vmul.f32 %v2095, 0.5
    %v2104 = vmul.f32 %v2096, %v2100
    %v2105 = vmul.f32 %v2097, %v2101
    %v2106 = vmul.f32 %v2098, %v2102
    %v2107 = vmul.f32 %v2099, %v2103
    %v2108 = vld [vmem:[%s5] sm:$0xff]
    %v2109 = vld [vmem:[%s5 + $0x8] sm:$0xff]
    %v2110 = vld [vmem:[%s5 + $0x10] sm:$0xff]
    %v2111 = vld [vmem:[%s5 + $0x18] sm:$0xff]
    %v2112 = vld [vmem:[%s6] sm:$0xff]
    %v2113 = vld [vmem:[%s6 + $0x8] sm:$0xff]
    %v2114 = vld [vmem:[%s6 + $0x10] sm:$0xff]
    %v2115 = vld [vmem:[%s6 + $0x18] sm:$0xff]
    %2117 = vset.pattern.permute.xlu0 0
    %2118 = vperm.xlu0 %2117, %v2112
    %v2119 = vpop.permute.xlu0 %2118
    %2122 = vset.pattern.permute.xlu0 0
    %2123 = vperm.xlu0 %2122, %v2113
    %v2124 = vpop.permute.xlu0 %2123
    %2127 = vset.pattern.permute.xlu0 0
    %2128 = vperm.xlu0 %2127, %v2114
    %v2129 = vpop.permute.xlu0 %2128
    %2132 = vset.pattern.permute.xlu0 0
    %2133 = vperm.xlu0 %2132, %v2115
    %v2134 = vpop.permute.xlu0 %2133
    %v2137 = vsel %vm109, %v2108, 0
    %v2140 = vsel %vm109, %v2109, 0
    %v2143 = vsel %vm109, %v2110, 0
    %v2146 = vsel %vm109, %v2111, 0
    %2148 = vmatprep.subr.mxu0 0.0
    %2149 = vmatpush1.msra.mxu0 %v2104
    %2150 = vmatprep.subr.mxu0 0.0
    %2151 = vmatpush1.msra.mxu0 %v2105
    %2152 = vmatprep.subr.mxu0 0.0
    %2153 = vmatpush1.msra.mxu0 %v2106
    %2154 = vmatprep.subr.mxu0 0.0
    %2155 = vmatpush1.msra.mxu0 %v2107
    %2156 = vmatprep.subr.mxu0 0.0
    %2157 = vmatpush1.msra.mxu0 %v2100
    %2158 = vmatprep.subr.mxu0 0.0
    %2159 = vmatpush1.msra.mxu0 %v2101
    %2160 = vmatprep.subr.mxu0 0.0
    %2161 = vmatpush1.msra.mxu0 %v2102
    %2162 = vmatprep.subr.mxu0 0.0
    %2163 = vmatpush1.msra.mxu0 %v2103
    %2164 = vmatprep.subr.mxu0 0.0
    %2165 = vmatpush1.msra.mxu0 0.0
    %2166 = vmatprep.subr.mxu0 0.0
    %2167 = vmatpush1.msra.mxu0 0.0
    %2168 = vmatprep.subr.mxu0 0.0
    %2169 = vmatpush1.msra.mxu0 0.0
    %2170 = vmatprep.subr.mxu0 0.0
    %2171 = vmatpush1.msra.mxu0 0.0
    %2172 = vmatprep.subr.mxu0 0.0
    %2173 = vmatpush1.msra.mxu0 0.0
    %2174 = vmatprep.subr.mxu0 0.0
    %2175 = vmatpush1.msra.mxu0 0.0
    %2176 = vmatprep.subr.mxu0 0.0
    %2177 = vmatpush1.msra.mxu0 0.0
    %2178 = vmatprep.subr.mxu0 0.0
    %2179 = vmatpush1.msra.mxu0 0.0
    %2180 = vmatprep.subr.mxu0 0.0
    %2181 = vmatpush1.msra.mxu0 0.0
    %2182 = vmatprep.subr.mxu0 0.0
    %2183 = vmatpush1.msra.mxu0 0.0
    %2184 = vmatprep.subr.mxu0 0.0
    %2185 = vmatpush1.msra.mxu0 0.0
    %2186 = vmatprep.subr.mxu0 0.0
    %2187 = vmatpush1.msra.mxu0 0.0
    %2188 = vmatprep.subr.mxu0 0.0
    %2189 = vmatpush1.msra.mxu0 0.0
    %2190 = vmatprep.subr.mxu0 0.0
    %2191 = vmatpush1.msra.mxu0 0.0
    %2192 = vmatprep.subr.mxu0 0.0
    %2193 = vmatpush1.msra.mxu0 0.0
    %2194 = vmatprep.subr.mxu0 0.0
    %2195 = vmatpush1.msra.mxu0 0.0
    %2196 = vmatprep.subr.mxu0 0.0
    %2197 = vmatpush1.msra.mxu0 0.0
    %2198 = vmatprep.subr.mxu0 0.0
    %2199 = vmatpush1.msra.mxu0 0.0
    %2200 = vmatprep.subr.mxu0 0.0
    %2201 = vmatpush1.msra.mxu0 0.0
    %2202 = vmatprep.subr.mxu0 0.0
    %2203 = vmatpush1.msra.mxu0 0.0
    %2204 = vmatprep.subr.mxu0 0.0
    %2205 = vmatpush1.msra.mxu0 0.0
    %2206 = vmatprep.subr.mxu0 0.0
    %2207 = vmatpush1.msra.mxu0 0.0
    %2208 = vmatprep.subr.mxu0 0.0
    %2209 = vmatpush1.msra.mxu0 0.0
    %2210 = vmatprep.subr.mxu0 0.0
    %2211 = vmatpush1.msra.mxu0 0.0
    %2212 = vmatprep.mubr.f32.mxu0 0.0
    %2213 = vmatmul.mubr.f32.gmra.mrb[0].mxu0 %v2137
    %v2214 = vpop.f32.mrb[0].mxu0
    %v2215 = vadd.f32 %v2119, %v2214
    %v2216 = vpop.f32.mrb[0].mxu0
    %2217 = vmatprep.mubr.f32.mxu0 0.0
    %2218 = vmatmul.mubr.f32.gmra.mrb[0].mxu0 %v2140
    %v2219 = vpop.f32.mrb[0].mxu0
    %v2220 = vadd.f32 %v2124, %v2219
    %v2221 = vpop.f32.mrb[0].mxu0
    %2222 = vmatprep.mubr.f32.mxu0 0.0
    %2223 = vmatmul.mubr.f32.gmra.mrb[0].mxu0 %v2143
    %v2224 = vpop.f32.mrb[0].mxu0
    %v2225 = vadd.f32 %v2129, %v2224
    %v2226 = vpop.f32.mrb[0].mxu0
    %2227 = vmatprep.mubr.f32.mxu0 0.0
    %2228 = vmatmul.mubr.f32.gmra.mrb[0].mxu0 %v2146
    %v2229 = vpop.f32.mrb[0].mxu0
    %v2230 = vadd.f32 %v2134, %v2229
    %v2231 = vpop.f32.mrb[0].mxu0
    %2232 = vdwg.mxu0
    %v2233 = vand.u32 2147483647, %v2215
    %vm2234 = vcmp.le.f32.partialorder %v2233, 0.7853982
    %vm2235 = vcmp.lt.s32.totalorder %v2215, 0
    %v2236 = vand.u32 %v2215, 2139095040
    %v2237 = vshrl.u32 %v2236, 23
    %v2238 = vsub.s32 %v2237, 127
    %v2239 = vand.u32 2147483647, %v2215
    %v2240 = vand.u32 %v2239, 8388607
    %v2241 = vor.u32 %v2240, 8388608
    %v2242 = vsub.s32 0, %v2241
    %v2243 = vadd.s32 %v2238, 1
    %vm2244 = vcmp.gt.s32.totalorder %v2243, 0
    %v2245 = vsel %vm2244, %v2243, 0
    %v2246 = vshrl.u32 %v2245, 5
    %v2247 = vand.u32 %v2245, 31
    %v2248 = vsub.s32 32, %v2247
    %v2249 = vshrl.u32 683565275, %v2248
    %v2250 = vshll.u32 683565275, %v2247
    %v2251 = vshrl.u32 2475754826, %v2248
    %v2252 = vor.u32 %v2250, %v2251
    %v2253 = vshll.u32 2475754826, %v2247
    %v2254 = vshrl.u32 2131351028, %v2248
    %v2255 = vor.u32 %v2253, %v2254
    %v2256 = vshll.u32 2131351028, %v2247
    %v2257 = vshrl.u32 2102212464, %v2248
    %v2258 = vor.u32 %v2256, %v2257
    %v2259 = vshll.u32 2102212464, %v2247
    %v2260 = vshrl.u32 920167782, %v2248
    %v2261 = vor.u32 %v2259, %v2260
    %v2262 = vshll.u32 920167782, %v2247
    %v2263 = vshrl.u32 1326507024, %v2248
    %v2264 = vor.u32 %v2262, %v2263
    %vm2265 = vcmp.lt.s32.totalorder %v2246, 1
    %vm2266 = vcmp.lt.s32.totalorder %v2246, 2
    %vm2267 = vcmp.lt.s32.totalorder %v2246, 3
    %vm2268 = vcmp.lt.s32.totalorder %v2246, 4
    %v2269 = vsel %vm2265, %v2249, %v2252
    %v2270 = vsel %vm2268, %v2258, 2102212464
    %v2271 = vsel %vm2267, %v2255, %v2270
    %v2272 = vsel %vm2266, %v2269, %v2271
    %v2273 = vsel %vm2265, %v2252, %v2255
    %v2274 = vsel %vm2268, %v2261, 920167782
    %v2275 = vsel %vm2267, %v2258, %v2274
    %v2276 = vsel %vm2266, %v2273, %v2275
    %v2277 = vsel %vm2265, %v2255, %v2258
    %v2278 = vsel %vm2268, %v2264, 1326507024
    %v2279 = vsel %vm2267, %v2261, %v2278
    %v2280 = vsel %vm2266, %v2277, %v2279
    %v2281 = vshll.u32 %v2241, 8
    %v2282 = vmul.u32.u64.compose %v2281, %v2280
    %v2283 = vextract.low.u32 %v2282
    %v2284 = vextract.high.u32 %v2282
    %v2285 = vmul.u32.u64.compose %v2281, %v2276
    %v2286 = vextract.low.u32 %v2285
    %v2287 = vextract.high.u32 %v2285
    %v2288 = vmul.u32 %v2281, %v2272
    %v2289 = vadd.s32 %v2284, %v2286
    %vm2290 = vc.u32 %v2284, %v2286
    %v2291 = vadd.s32 %v2287, 1
    %v2292 = vsel %vm2290, %v2291, %v2287
    %v2293 = vadd.s32 %v2288, %v2292
    %v2294 = vadd.s32 %v2293, 536870912
    %v2295 = vshrl.u32 %v2294, 30
    %v2296 = vshll.u32 %v2295, 30
    %v2297 = vsub.s32 %v2293, %v2296
    %vm2298 = vcmp.lt.s32.totalorder %v2297, 0
    %v2299 = vsub.s32 0, %v2297
    %v2300 = vsel %vm2298, %v2299, %v2297
    %v2301 = vclz %v2300
    %v2302 = vsub.s32 %v2301, 2
    %vm2303 = vcmp.gt.s32.totalorder 0, %v2302
    %v2304 = vsel %vm2303, 0, %v2302
    %v2305 = vsub.s32 32, %v2304
    %v2306 = vshll.u32 %v2297, %v2304
    %v2307 = vshrl.u32 %v2289, %v2305
    %v2308 = vor.u32 %v2306, %v2307
    %v2309 = vsub.s32 4294967266, %v2304
    %v2310 = vadd.s32 %v2309, 127
    %v2311 = vshll.u32 %v2310, 23
    %v2312 = vor.u32 4788187, %v2311
    %v2313 = vand.u32 2147483647, %v2312
    %v2315 = vcvt.s32.f32 %v2308
    %v2316 = vmul.f32 %v2315, %v2313
    %v2317 = vxor.u32 %v2316, 2147483648
    %v2318 = vsel %vm2235, %v2317, %v2316
    %v2319 = vsub.s32 4, %v2295
    %v2320 = vsel %vm2235, %v2319, %v2295
    %v2321 = vsel %vm2234, %v2215, %v2318
    %v2322 = vsel %vm2234, 0, %v2320
    %v2323 = vcosq.f32.pop %v2321
    %v2324 = vsinq.f32.pop %v2321
    %vm2325 = vweird.f32 %v2215
    %v2326 = vadd.s32 %v2322, 3
    %v2327 = vand.u32 %v2326, 3
    %vm2328 = vcmp.lt.s32.totalorder %v2327, 2
    %vm2329 = vcmp.eq.s32.totalorder %v2327, 0
    %v2330 = vxor.u32 %v2324, 2147483648
    %v2331 = vsel %vm2329, %v2323, %v2330
    %vm2332 = vcmp.eq.s32.totalorder %v2327, 2
    %v2333 = vxor.u32 %v2323, 2147483648
    %v2334 = vsel %vm2332, %v2333, %v2324
    %v2335 = vsel %vm2328, %v2331, %v2334
    %v2336 = vsel %vm2325, nan, %v2335
    %v2337 = vand.u32 2147483647, %v2220
    %vm2338 = vcmp.le.f32.partialorder %v2337, 0.7853982
    %vm2339 = vcmp.lt.s32.totalorder %v2220, 0
    %v2340 = vand.u32 %v2220, 2139095040
    %v2341 = vshrl.u32 %v2340, 23
    %v2342 = vsub.s32 %v2341, 127
    %v2343 = vand.u32 2147483647, %v2220
    %v2344 = vand.u32 %v2343, 8388607
    %v2345 = vor.u32 %v2344, 8388608
    %v2346 = vsub.s32 0, %v2345
    %v2347 = vadd.s32 %v2342, 1
    %vm2348 = vcmp.gt.s32.totalorder %v2347, 0
    %v2349 = vsel %vm2348, %v2347, 0
    %v2350 = vshrl.u32 %v2349, 5
    %v2351 = vand.u32 %v2349, 31
    %v2352 = vsub.s32 32, %v2351
    %v2353 = vshrl.u32 683565275, %v2352
    %v2354 = vshll.u32 683565275, %v2351
    %v2355 = vshrl.u32 2475754826, %v2352
    %v2356 = vor.u32 %v2354, %v2355
    %v2357 = vshll.u32 2475754826, %v2351
    %v2358 = vshrl.u32 2131351028, %v2352
    %v2359 = vor.u32 %v2357, %v2358
    %v2360 = vshll.u32 2131351028, %v2351
    %v2361 = vshrl.u32 2102212464, %v2352
    %v2362 = vor.u32 %v2360, %v2361
    %v2363 = vshll.u32 2102212464, %v2351
    %v2364 = vshrl.u32 920167782, %v2352
    %v2365 = vor.u32 %v2363, %v2364
    %v2366 = vshll.u32 920167782, %v2351
    %v2367 = vshrl.u32 1326507024, %v2352
    %v2368 = vor.u32 %v2366, %v2367
    %vm2369 = vcmp.lt.s32.totalorder %v2350, 1
    %vm2370 = vcmp.lt.s32.totalorder %v2350, 2
    %vm2371 = vcmp.lt.s32.totalorder %v2350, 3
    %vm2372 = vcmp.lt.s32.totalorder %v2350, 4
    %v2373 = vsel %vm2369, %v2353, %v2356
    %v2374 = vsel %vm2372, %v2362, 2102212464
    %v2375 = vsel %vm2371, %v2359, %v2374
    %v2376 = vsel %vm2370, %v2373, %v2375
    %v2377 = vsel %vm2369, %v2356, %v2359
    %v2378 = vsel %vm2372, %v2365, 920167782
    %v2379 = vsel %vm2371, %v2362, %v2378
    %v2380 = vsel %vm2370, %v2377, %v2379
    %v2381 = vsel %vm2369, %v2359, %v2362
    %v2382 = vsel %vm2372, %v2368, 1326507024
    %v2383 = vsel %vm2371, %v2365, %v2382
    %v2384 = vsel %vm2370, %v2381, %v2383
    %v2385 = vshll.u32 %v2345, 8
    %v2386 = vmul.u32.u64.compose %v2385, %v2384
    %v2387 = vextract.low.u32 %v2386
    %v2388 = vextract.high.u32 %v2386
    %v2389 = vmul.u32.u64.compose %v2385, %v2380
    %v2390 = vextract.low.u32 %v2389
    %v2391 = vextract.high.u32 %v2389
    %v2392 = vmul.u32 %v2385, %v2376
    %v2393 = vadd.s32 %v2388, %v2390
    %vm2394 = vc.u32 %v2388, %v2390
    %v2395 = vadd.s32 %v2391, 1
    %v2396 = vsel %vm2394, %v2395, %v2391
    %v2397 = vadd.s32 %v2392, %v2396
    %v2398 = vadd.s32 %v2397, 536870912
    %v2399 = vshrl.u32 %v2398, 30
    %v2400 = vshll.u32 %v2399, 30
    %v2401 = vsub.s32 %v2397, %v2400
    %vm2402 = vcmp.lt.s32.totalorder %v2401, 0
    %v2403 = vsub.s32 0, %v2401
    %v2404 = vsel %vm2402, %v2403, %v2401
    %v2405 = vclz %v2404
    %v2406 = vsub.s32 %v2405, 2
    %vm2407 = vcmp.gt.s32.totalorder 0, %v2406
    %v2408 = vsel %vm2407, 0, %v2406
    %v2409 = vsub.s32 32, %v2408
    %v2410 = vshll.u32 %v2401, %v2408
    %v2411 = vshrl.u32 %v2393, %v2409
    %v2412 = vor.u32 %v2410, %v2411
    %v2413 = vsub.s32 4294967266, %v2408
    %v2414 = vadd.s32 %v2413, 127
    %v2415 = vshll.u32 %v2414, 23
    %v2416 = vor.u32 4788187, %v2415
    %v2417 = vand.u32 2147483647, %v2416
    %v2419 = vcvt.s32.f32 %v2412
    %v2420 = vmul.f32 %v2419, %v2417
    %v2421 = vxor.u32 %v2420, 2147483648
    %v2422 = vsel %vm2339, %v2421, %v2420
    %v2423 = vsub.s32 4, %v2399
    %v2424 = vsel %vm2339, %v2423, %v2399
    %v2425 = vsel %vm2338, %v2220, %v2422
    %v2426 = vsel %vm2338, 0, %v2424
    %v2427 = vcosq.f32.pop %v2425
    %v2428 = vsinq.f32.pop %v2425
    %vm2429 = vweird.f32 %v2220
    %v2430 = vadd.s32 %v2426, 3
    %v2431 = vand.u32 %v2430, 3
    %vm2432 = vcmp.lt.s32.totalorder %v2431, 2
    %vm2433 = vcmp.eq.s32.totalorder %v2431, 0
    %v2434 = vxor.u32 %v2428, 2147483648
    %v2435 = vsel %vm2433, %v2427, %v2434
    %vm2436 = vcmp.eq.s32.totalorder %v2431, 2
    %v2437 = vxor.u32 %v2427, 2147483648
    %v2438 = vsel %vm2436, %v2437, %v2428
    %v2439 = vsel %vm2432, %v2435, %v2438
    %v2440 = vsel %vm2429, nan, %v2439
    %v2441 = vand.u32 2147483647, %v2225
    %vm2442 = vcmp.le.f32.partialorder %v2441, 0.7853982
    %vm2443 = vcmp.lt.s32.totalorder %v2225, 0
    %v2444 = vand.u32 %v2225, 2139095040
    %v2445 = vshrl.u32 %v2444, 23
    %v2446 = vsub.s32 %v2445, 127
    %v2447 = vand.u32 2147483647, %v2225
    %v2448 = vand.u32 %v2447, 8388607
    %v2449 = vor.u32 %v2448, 8388608
    %v2450 = vsub.s32 0, %v2449
    %v2451 = vadd.s32 %v2446, 1
    %vm2452 = vcmp.gt.s32.totalorder %v2451, 0
    %v2453 = vsel %vm2452, %v2451, 0
    %v2454 = vshrl.u32 %v2453, 5
    %v2455 = vand.u32 %v2453, 31
    %v2456 = vsub.s32 32, %v2455
    %v2457 = vshrl.u32 683565275, %v2456
    %v2458 = vshll.u32 683565275, %v2455
    %v2459 = vshrl.u32 2475754826, %v2456
    %v2460 = vor.u32 %v2458, %v2459
    %v2461 = vshll.u32 2475754826, %v2455
    %v2462 = vshrl.u32 2131351028, %v2456
    %v2463 = vor.u32 %v2461, %v2462
    %v2464 = vshll.u32 2131351028, %v2455
    %v2465 = vshrl.u32 2102212464, %v2456
    %v2466 = vor.u32 %v2464, %v2465
    %v2467 = vshll.u32 2102212464, %v2455
    %v2468 = vshrl.u32 920167782, %v2456
    %v2469 = vor.u32 %v2467, %v2468
    %v2470 = vshll.u32 920167782, %v2455
    %v2471 = vshrl.u32 1326507024, %v2456
    %v2472 = vor.u32 %v2470, %v2471
    %vm2473 = vcmp.lt.s32.totalorder %v2454, 1
    %vm2474 = vcmp.lt.s32.totalorder %v2454, 2
    %vm2475 = vcmp.lt.s32.totalorder %v2454, 3
    %vm2476 = vcmp.lt.s32.totalorder %v2454, 4
    %v2477 = vsel %vm2473, %v2457, %v2460
    %v2478 = vsel %vm2476, %v2466, 2102212464
    %v2479 = vsel %vm2475, %v2463, %v2478
    %v2480 = vsel %vm2474, %v2477, %v2479
    %v2481 = vsel %vm2473, %v2460, %v2463
    %v2482 = vsel %vm2476, %v2469, 920167782
    %v2483 = vsel %vm2475, %v2466, %v2482
    %v2484 = vsel %vm2474, %v2481, %v2483
    %v2485 = vsel %vm2473, %v2463, %v2466
    %v2486 = vsel %vm2476, %v2472, 1326507024
    %v2487 = vsel %vm2475, %v2469, %v2486
    %v2488 = vsel %vm2474, %v2485, %v2487
    %v2489 = vshll.u32 %v2449, 8
    %v2490 = vmul.u32.u64.compose %v2489, %v2488
    %v2491 = vextract.low.u32 %v2490
    %v2492 = vextract.high.u32 %v2490
    %v2493 = vmul.u32.u64.compose %v2489, %v2484
    %v2494 = vextract.low.u32 %v2493
    %v2495 = vextract.high.u32 %v2493
    %v2496 = vmul.u32 %v2489, %v2480
    %v2497 = vadd.s32 %v2492, %v2494
    %vm2498 = vc.u32 %v2492, %v2494
    %v2499 = vadd.s32 %v2495, 1
    %v2500 = vsel %vm2498, %v2499, %v2495
    %v2501 = vadd.s32 %v2496, %v2500
    %v2502 = vadd.s32 %v2501, 536870912
    %v2503 = vshrl.u32 %v2502, 30
    %v2504 = vshll.u32 %v2503, 30
    %v2505 = vsub.s32 %v2501, %v2504
    %vm2506 = vcmp.lt.s32.totalorder %v2505, 0
    %v2507 = vsub.s32 0, %v2505
    %v2508 = vsel %vm2506, %v2507, %v2505
    %v2509 = vclz %v2508
    %v2510 = vsub.s32 %v2509, 2
    %vm2511 = vcmp.gt.s32.totalorder 0, %v2510
    %v2512 = vsel %vm2511, 0, %v2510
    %v2513 = vsub.s32 32, %v2512
    %v2514 = vshll.u32 %v2505, %v2512
    %v2515 = vshrl.u32 %v2497, %v2513
    %v2516 = vor.u32 %v2514, %v2515
    %v2517 = vsub.s32 4294967266, %v2512
    %v2518 = vadd.s32 %v2517, 127
    %v2519 = vshll.u32 %v2518, 23
    %v2520 = vor.u32 4788187, %v2519
    %v2521 = vand.u32 2147483647, %v2520
    %v2523 = vcvt.s32.f32 %v2516
    %v2524 = vmul.f32 %v2523, %v2521
    %v2525 = vxor.u32 %v2524, 2147483648
    %v2526 = vsel %vm2443, %v2525, %v2524
    %v2527 = vsub.s32 4, %v2503
    %v2528 = vsel %vm2443, %v2527, %v2503
    %v2529 = vsel %vm2442, %v2225, %v2526
    %v2530 = vsel %vm2442, 0, %v2528
    %v2531 = vcosq.f32.pop %v2529
    %v2532 = vsinq.f32.pop %v2529
    %vm2533 = vweird.f32 %v2225
    %v2534 = vadd.s32 %v2530, 3
    %v2535 = vand.u32 %v2534, 3
    %vm2536 = vcmp.lt.s32.totalorder %v2535, 2
    %vm2537 = vcmp.eq.s32.totalorder %v2535, 0
    %v2538 = vxor.u32 %v2532, 2147483648
    %v2539 = vsel %vm2537, %v2531, %v2538
    %vm2540 = vcmp.eq.s32.totalorder %v2535, 2
    %v2541 = vxor.u32 %v2531, 2147483648
    %v2542 = vsel %vm2540, %v2541, %v2532
    %v2543 = vsel %vm2536, %v2539, %v2542
    %v2544 = vsel %vm2533, nan, %v2543
    %v2545 = vand.u32 2147483647, %v2230
    %vm2546 = vcmp.le.f32.partialorder %v2545, 0.7853982
    %vm2547 = vcmp.lt.s32.totalorder %v2230, 0
    %v2548 = vand.u32 %v2230, 2139095040
    %v2549 = vshrl.u32 %v2548, 23
    %v2550 = vsub.s32 %v2549, 127
    %v2551 = vand.u32 2147483647, %v2230
    %v2552 = vand.u32 %v2551, 8388607
    %v2553 = vor.u32 %v2552, 8388608
    %v2554 = vsub.s32 0, %v2553
    %v2555 = vadd.s32 %v2550, 1
    %vm2556 = vcmp.gt.s32.totalorder %v2555, 0
    %v2557 = vsel %vm2556, %v2555, 0
    %v2558 = vshrl.u32 %v2557, 5
    %v2559 = vand.u32 %v2557, 31
    %v2560 = vsub.s32 32, %v2559
    %v2561 = vshrl.u32 683565275, %v2560
    %v2562 = vshll.u32 683565275, %v2559
    %v2563 = vshrl.u32 2475754826, %v2560
    %v2564 = vor.u32 %v2562, %v2563
    %v2565 = vshll.u32 2475754826, %v2559
    %v2566 = vshrl.u32 2131351028, %v2560
    %v2567 = vor.u32 %v2565, %v2566
    %v2568 = vshll.u32 2131351028, %v2559
    %v2569 = vshrl.u32 2102212464, %v2560
    %v2570 = vor.u32 %v2568, %v2569
    %v2571 = vshll.u32 2102212464, %v2559
    %v2572 = vshrl.u32 920167782, %v2560
    %v2573 = vor.u32 %v2571, %v2572
    %v2574 = vshll.u32 920167782, %v2559
    %v2575 = vshrl.u32 1326507024, %v2560
    %v2576 = vor.u32 %v2574, %v2575
    %vm2577 = vcmp.lt.s32.totalorder %v2558, 1
    %vm2578 = vcmp.lt.s32.totalorder %v2558, 2
    %vm2579 = vcmp.lt.s32.totalorder %v2558, 3
    %vm2580 = vcmp.lt.s32.totalorder %v2558, 4
    %v2581 = vsel %vm2577, %v2561, %v2564
    %v2582 = vsel %vm2580, %v2570, 2102212464
    %v2583 = vsel %vm2579, %v2567, %v2582
    %v2584 = vsel %vm2578, %v2581, %v2583
    %v2585 = vsel %vm2577, %v2564, %v2567
    %v2586 = vsel %vm2580, %v2573, 920167782
    %v2587 = vsel %vm2579, %v2570, %v2586
    %v2588 = vsel %vm2578, %v2585, %v2587
    %v2589 = vsel %vm2577, %v2567, %v2570
    %v2590 = vsel %vm2580, %v2576, 1326507024
    %v2591 = vsel %vm2579, %v2573, %v2590
    %v2592 = vsel %vm2578, %v2589, %v2591
    %v2593 = vshll.u32 %v2553, 8
    %v2594 = vmul.u32.u64.compose %v2593, %v2592
    %v2595 = vextract.low.u32 %v2594
    %v2596 = vextract.high.u32 %v2594
    %v2597 = vmul.u32.u64.compose %v2593, %v2588
    %v2598 = vextract.low.u32 %v2597
    %v2599 = vextract.high.u32 %v2597
    %v2600 = vmul.u32 %v2593, %v2584
    %v2601 = vadd.s32 %v2596, %v2598
    %vm2602 = vc.u32 %v2596, %v2598
    %v2603 = vadd.s32 %v2599, 1
    %v2604 = vsel %vm2602, %v2603, %v2599
    %v2605 = vadd.s32 %v2600, %v2604
    %v2606 = vadd.s32 %v2605, 536870912
    %v2607 = vshrl.u32 %v2606, 30
    %v2608 = vshll.u32 %v2607, 30
    %v2609 = vsub.s32 %v2605, %v2608
    %vm2610 = vcmp.lt.s32.totalorder %v2609, 0
    %v2611 = vsub.s32 0, %v2609
    %v2612 = vsel %vm2610, %v2611, %v2609
    %v2613 = vclz %v2612
    %v2614 = vsub.s32 %v2613, 2
    %vm2615 = vcmp.gt.s32.totalorder 0, %v2614
    %v2616 = vsel %vm2615, 0, %v2614
    %v2617 = vsub.s32 32, %v2616
    %v2618 = vshll.u32 %v2609, %v2616
    %v2619 = vshrl.u32 %v2601, %v2617
    %v2620 = vor.u32 %v2618, %v2619
    %v2621 = vsub.s32 4294967266, %v2616
    %v2622 = vadd.s32 %v2621, 127
    %v2623 = vshll.u32 %v2622, 23
    %v2624 = vor.u32 4788187, %v2623
    %v2625 = vand.u32 2147483647, %v2624
    %v2627 = vcvt.s32.f32 %v2620
    %v2628 = vmul.f32 %v2627, %v2625
    %v2629 = vxor.u32 %v2628, 2147483648
    %v2630 = vsel %vm2547, %v2629, %v2628
    %v2631 = vsub.s32 4, %v2607
    %v2632 = vsel %vm2547, %v2631, %v2607
    %v2633 = vsel %vm2546, %v2230, %v2630
    %v2634 = vsel %vm2546, 0, %v2632
    %v2635 = vcosq.f32.pop %v2633
    %v2636 = vsinq.f32.pop %v2633
    %vm2637 = vweird.f32 %v2230
    %v2638 = vadd.s32 %v2634, 3
    %v2639 = vand.u32 %v2638, 3
    %vm2640 = vcmp.lt.s32.totalorder %v2639, 2
    %vm2641 = vcmp.eq.s32.totalorder %v2639, 0
    %v2642 = vxor.u32 %v2636, 2147483648
    %v2643 = vsel %vm2641, %v2635, %v2642
    %vm2644 = vcmp.eq.s32.totalorder %v2639, 2
    %v2645 = vxor.u32 %v2635, 2147483648
    %v2646 = vsel %vm2644, %v2645, %v2636
    %v2647 = vsel %vm2640, %v2643, %v2646
    %v2648 = vsel %vm2637, nan, %v2647
    %v2649 = vmul.f32 %v2336, %v2544
    %v2650 = vmul.f32 %v2440, %v2648
    %v2651 = vld [vmem:[%s7] sm:$0xff]
    %v2652 = vld [vmem:[%s7 + $0x8] sm:$0xff]
    %v2653 = vld [vmem:[%s8] sm:$0xff]
    %v2654 = vld [vmem:[%s8 + $0x8] sm:$0xff]
    %2656 = vset.pattern.permute.xlu0 0
    %2657 = vperm.xlu0 %2656, %v2653
    %v2658 = vpop.permute.xlu0 %2657
    %2661 = vset.pattern.permute.xlu0 0
    %2662 = vperm.xlu0 %2661, %v2654
    %v2663 = vpop.permute.xlu0 %2662
    %vm2665 = vcmask 261120
    %v2667 = vsel %vm2665, %v2651, 0
    %v2670 = vsel %vm2665, %v2652, 0
    %2672 = vmatprep.subr.mxu0 0.0
    %2673 = vmatpush1.msra.mxu0 %v2649
    %2674 = vmatprep.subr.mxu0 0.0
    %2675 = vmatpush1.msra.mxu0 %v2650
    %2676 = vmatprep.subr.mxu0 0.0
    %2677 = vmatpush1.msra.mxu0 %v2544
    %2678 = vmatprep.subr.mxu0 0.0
    %2679 = vmatpush1.msra.mxu0 %v2648
    %2680 = vmatprep.subr.mxu0 0.0
    %2681 = vmatpush1.msra.mxu0 0.0
    %2682 = vmatprep.subr.mxu0 0.0
    %2683 = vmatpush1.msra.mxu0 0.0
    %2684 = vmatprep.subr.mxu0 0.0
    %2685 = vmatpush1.msra.mxu0 0.0
    %2686 = vmatprep.subr.mxu0 0.0
    %2687 = vmatpush1.msra.mxu0 0.0
    %2688 = vmatprep.subr.mxu0 0.0
    %2689 = vmatpush1.msra.mxu0 0.0
    %2690 = vmatprep.subr.mxu0 0.0
    %2691 = vmatpush1.msra.mxu0 0.0
    %2692 = vmatprep.subr.mxu0 0.0
    %2693 = vmatpush1.msra.mxu0 0.0
    %2694 = vmatprep.subr.mxu0 0.0
    %2695 = vmatpush1.msra.mxu0 0.0
    %2696 = vmatprep.subr.mxu0 0.0
    %2697 = vmatpush1.msra.mxu0 0.0
    %2698 = vmatprep.subr.mxu0 0.0
    %2699 = vmatpush1.msra.mxu0 0.0
    %2700 = vmatprep.subr.mxu0 0.0
    %2701 = vmatpush1.msra.mxu0 0.0
    %2702 = vmatprep.subr.mxu0 0.0
    %2703 = vmatpush1.msra.mxu0 0.0
    %2704 = vmatprep.subr.mxu0 0.0
    %2705 = vmatpush1.msra.mxu0 0.0
    %2706 = vmatprep.subr.mxu0 0.0
    %2707 = vmatpush1.msra.mxu0 0.0
    %2708 = vmatprep.subr.mxu0 0.0
    %2709 = vmatpush1.msra.mxu0 0.0
    %2710 = vmatprep.subr.mxu0 0.0
    %2711 = vmatpush1.msra.mxu0 0.0
    %2712 = vmatprep.subr.mxu0 0.0
    %2713 = vmatpush1.msra.mxu0 0.0
    %2714 = vmatprep.subr.mxu0 0.0
    %2715 = vmatpush1.msra.mxu0 0.0
    %2716 = vmatprep.subr.mxu0 0.0
    %2717 = vmatpush1.msra.mxu0 0.0
    %2718 = vmatprep.subr.mxu0 0.0
    %2719 = vmatpush1.msra.mxu0 0.0
    %2720 = vmatprep.subr.mxu0 0.0
    %2721 = vmatpush1.msra.mxu0 0.0
    %2722 = vmatprep.subr.mxu0 0.0
    %2723 = vmatpush1.msra.mxu0 0.0
    %2724 = vmatprep.subr.mxu0 0.0
    %2725 = vmatpush1.msra.mxu0 0.0
    %2726 = vmatprep.subr.mxu0 0.0
    %2727 = vmatpush1.msra.mxu0 0.0
    %2728 = vmatprep.subr.mxu0 0.0
    %2729 = vmatpush1.msra.mxu0 0.0
    %2730 = vmatprep.subr.mxu0 0.0
    %2731 = vmatpush1.msra.mxu0 0.0
    %2732 = vmatprep.subr.mxu0 0.0
    %2733 = vmatpush1.msra.mxu0 0.0
    %2734 = vmatprep.subr.mxu0 0.0
    %2735 = vmatpush1.msra.mxu0 0.0
    %2736 = vmatprep.mubr.f32.mxu0 0.0
    %2737 = vmatmul.mubr.f32.gmra.mrb[0].mxu0 %v2667
    %v2738 = vpop.f32.mrb[0].mxu0
    %v2739 = vadd.f32 %v2658, %v2738
    %v2740 = vpop.f32.mrb[0].mxu0
    %2741 = vmatprep.mubr.f32.mxu0 0.0
    %2742 = vmatmul.mubr.f32.gmra.mrb[0].mxu0 %v2670
    %v2743 = vpop.f32.mrb[0].mxu0
    %v2744 = vadd.f32 %v2663, %v2743
    %v2745 = vpop.f32.mrb[0].mxu0
    %2746 = vdwg.mxu0
    %v2747 = vand.u32 2147483647, %v2739
    %vm2748 = vcmp.le.f32.partialorder %v2747, 0.7853982
    %vm2749 = vcmp.lt.s32.totalorder %v2739, 0
    %v2750 = vand.u32 %v2739, 2139095040
    %v2751 = vshrl.u32 %v2750, 23
    %v2752 = vsub.s32 %v2751, 127
    %v2753 = vand.u32 2147483647, %v2739
    %v2754 = vand.u32 %v2753, 8388607
    %v2755 = vor.u32 %v2754, 8388608
    %v2756 = vsub.s32 0, %v2755
    %v2757 = vadd.s32 %v2752, 1
    %vm2758 = vcmp.gt.s32.totalorder %v2757, 0
    %v2759 = vsel %vm2758, %v2757, 0
    %v2760 = vshrl.u32 %v2759, 5
    %v2761 = vand.u32 %v2759, 31
    %v2762 = vsub.s32 32, %v2761
    %v2763 = vshrl.u32 683565275, %v2762
    %v2764 = vshll.u32 683565275, %v2761
    %v2765 = vshrl.u32 2475754826, %v2762
    %v2766 = vor.u32 %v2764, %v2765
    %v2767 = vshll.u32 2475754826, %v2761
    %v2768 = vshrl.u32 2131351028, %v2762
    %v2769 = vor.u32 %v2767, %v2768
    %v2770 = vshll.u32 2131351028, %v2761
    %v2771 = vshrl.u32 2102212464, %v2762
    %v2772 = vor.u32 %v2770, %v2771
    %v2773 = vshll.u32 2102212464, %v2761
    %v2774 = vshrl.u32 920167782, %v2762
    %v2775 = vor.u32 %v2773, %v2774
    %v2776 = vshll.u32 920167782, %v2761
    %v2777 = vshrl.u32 1326507024, %v2762
    %v2778 = vor.u32 %v2776, %v2777
    %vm2779 = vcmp.lt.s32.totalorder %v2760, 1
    %vm2780 = vcmp.lt.s32.totalorder %v2760, 2
    %vm2781 = vcmp.lt.s32.totalorder %v2760, 3
    %vm2782 = vcmp.lt.s32.totalorder %v2760, 4
    %v2783 = vsel %vm2779, %v2763, %v2766
    %v2784 = vsel %vm2782, %v2772, 2102212464
    %v2785 = vsel %vm2781, %v2769, %v2784
    %v2786 = vsel %vm2780, %v2783, %v2785
    %v2787 = vsel %vm2779, %v2766, %v2769
    %v2788 = vsel %vm2782, %v2775, 920167782
    %v2789 = vsel %vm2781, %v2772, %v2788
    %v2790 = vsel %vm2780, %v2787, %v2789
    %v2791 = vsel %vm2779, %v2769, %v2772
    %v2792 = vsel %vm2782, %v2778, 1326507024
    %v2793 = vsel %vm2781, %v2775, %v2792
    %v2794 = vsel %vm2780, %v2791, %v2793
    %v2795 = vshll.u32 %v2755, 8
    %v2796 = vmul.u32.u64.compose %v2795, %v2794
    %v2797 = vextract.low.u32 %v2796
    %v2798 = vextract.high.u32 %v2796
    %v2799 = vmul.u32.u64.compose %v2795, %v2790
    %v2800 = vextract.low.u32 %v2799
    %v2801 = vextract.high.u32 %v2799
    %v2802 = vmul.u32 %v2795, %v2786
    %v2803 = vadd.s32 %v2798, %v2800
    %vm2804 = vc.u32 %v2798, %v2800
    %v2805 = vadd.s32 %v2801, 1
    %v2806 = vsel %vm2804, %v2805, %v2801
    %v2807 = vadd.s32 %v2802, %v2806
    %v2808 = vadd.s32 %v2807, 536870912
    %v2809 = vshrl.u32 %v2808, 30
    %v2810 = vshll.u32 %v2809, 30
    %v2811 = vsub.s32 %v2807, %v2810
    %vm2812 = vcmp.lt.s32.totalorder %v2811, 0
    %v2813 = vsub.s32 0, %v2811
    %v2814 = vsel %vm2812, %v2813, %v2811
    %v2815 = vclz %v2814
    %v2816 = vsub.s32 %v2815, 2
    %vm2817 = vcmp.gt.s32.totalorder 0, %v2816
    %v2818 = vsel %vm2817, 0, %v2816
    %v2819 = vsub.s32 32, %v2818
    %v2820 = vshll.u32 %v2811, %v2818
    %v2821 = vshrl.u32 %v2803, %v2819
    %v2822 = vor.u32 %v2820, %v2821
    %v2823 = vsub.s32 4294967266, %v2818
    %v2824 = vadd.s32 %v2823, 127
    %v2825 = vshll.u32 %v2824, 23
    %v2826 = vor.u32 4788187, %v2825
    %v2827 = vand.u32 2147483647, %v2826
    %v2829 = vcvt.s32.f32 %v2822
    %v2830 = vmul.f32 %v2829, %v2827
    %v2831 = vxor.u32 %v2830, 2147483648
    %v2832 = vsel %vm2749, %v2831, %v2830
    %v2833 = vsub.s32 4, %v2809
    %v2834 = vsel %vm2749, %v2833, %v2809
    %v2835 = vsel %vm2748, %v2739, %v2832
    %v2836 = vsel %vm2748, 0, %v2834
    %v2837 = vcosq.f32.pop %v2835
    %v2838 = vsinq.f32.pop %v2835
    %vm2839 = vweird.f32 %v2739
    %v2840 = vadd.s32 %v2836, 3
    %v2841 = vand.u32 %v2840, 3
    %vm2842 = vcmp.lt.s32.totalorder %v2841, 2
    %vm2843 = vcmp.eq.s32.totalorder %v2841, 0
    %v2844 = vxor.u32 %v2838, 2147483648
    %v2845 = vsel %vm2843, %v2837, %v2844
    %vm2846 = vcmp.eq.s32.totalorder %v2841, 2
    %v2847 = vxor.u32 %v2837, 2147483648
    %v2848 = vsel %vm2846, %v2847, %v2838
    %v2849 = vsel %vm2842, %v2845, %v2848
    %v2850 = vsel %vm2839, nan, %v2849
    %v2851 = vand.u32 2147483647, %v2744
    %vm2852 = vcmp.le.f32.partialorder %v2851, 0.7853982
    %vm2853 = vcmp.lt.s32.totalorder %v2744, 0
    %v2854 = vand.u32 %v2744, 2139095040
    %v2855 = vshrl.u32 %v2854, 23
    %v2856 = vsub.s32 %v2855, 127
    %v2857 = vand.u32 2147483647, %v2744
    %v2858 = vand.u32 %v2857, 8388607
    %v2859 = vor.u32 %v2858, 8388608
    %v2860 = vsub.s32 0, %v2859
    %v2861 = vadd.s32 %v2856, 1
    %vm2862 = vcmp.gt.s32.totalorder %v2861, 0
    %v2863 = vsel %vm2862, %v2861, 0
    %v2864 = vshrl.u32 %v2863, 5
    %v2865 = vand.u32 %v2863, 31
    %v2866 = vsub.s32 32, %v2865
    %v2867 = vshrl.u32 683565275, %v2866
    %v2868 = vshll.u32 683565275, %v2865
    %v2869 = vshrl.u32 2475754826, %v2866
    %v2870 = vor.u32 %v2868, %v2869
    %v2871 = vshll.u32 2475754826, %v2865
    %v2872 = vshrl.u32 2131351028, %v2866
    %v2873 = vor.u32 %v2871, %v2872
    %v2874 = vshll.u32 2131351028, %v2865
    %v2875 = vshrl.u32 2102212464, %v2866
    %v2876 = vor.u32 %v2874, %v2875
    %v2877 = vshll.u32 2102212464, %v2865
    %v2878 = vshrl.u32 920167782, %v2866
    %v2879 = vor.u32 %v2877, %v2878
    %v2880 = vshll.u32 920167782, %v2865
    %v2881 = vshrl.u32 1326507024, %v2866
    %v2882 = vor.u32 %v2880, %v2881
    %vm2883 = vcmp.lt.s32.totalorder %v2864, 1
    %vm2884 = vcmp.lt.s32.totalorder %v2864, 2
    %vm2885 = vcmp.lt.s32.totalorder %v2864, 3
    %vm2886 = vcmp.lt.s32.totalorder %v2864, 4
    %v2887 = vsel %vm2883, %v2867, %v2870
    %v2888 = vsel %vm2886, %v2876, 2102212464
    %v2889 = vsel %vm2885, %v2873, %v2888
    %v2890 = vsel %vm2884, %v2887, %v2889
    %v2891 = vsel %vm2883, %v2870, %v2873
    %v2892 = vsel %vm2886, %v2879, 920167782
    %v2893 = vsel %vm2885, %v2876, %v2892
    %v2894 = vsel %vm2884, %v2891, %v2893
    %v2895 = vsel %vm2883, %v2873, %v2876
    %v2896 = vsel %vm2886, %v2882, 1326507024
    %v2897 = vsel %vm2885, %v2879, %v2896
    %v2898 = vsel %vm2884, %v2895, %v2897
    %v2899 = vshll.u32 %v2859, 8
    %v2900 = vmul.u32.u64.compose %v2899, %v2898
    %v2901 = vextract.low.u32 %v2900
    %v2902 = vextract.high.u32 %v2900
    %v2903 = vmul.u32.u64.compose %v2899, %v2894
    %v2904 = vextract.low.u32 %v2903
    %v2905 = vextract.high.u32 %v2903
    %v2906 = vmul.u32 %v2899, %v2890
    %v2907 = vadd.s32 %v2902, %v2904
    %vm2908 = vc.u32 %v2902, %v2904
    %v2909 = vadd.s32 %v2905, 1
    %v2910 = vsel %vm2908, %v2909, %v2905
    %v2911 = vadd.s32 %v2906, %v2910
    %v2912 = vadd.s32 %v2911, 536870912
    %v2913 = vshrl.u32 %v2912, 30
    %v2914 = vshll.u32 %v2913, 30
    %v2915 = vsub.s32 %v2911, %v2914
    %vm2916 = vcmp.lt.s32.totalorder %v2915, 0
    %v2917 = vsub.s32 0, %v2915
    %v2918 = vsel %vm2916, %v2917, %v2915
    %v2919 = vclz %v2918
    %v2920 = vsub.s32 %v2919, 2
    %vm2921 = vcmp.gt.s32.totalorder 0, %v2920
    %v2922 = vsel %vm2921, 0, %v2920
    %v2923 = vsub.s32 32, %v2922
    %v2924 = vshll.u32 %v2915, %v2922
    %v2925 = vshrl.u32 %v2907, %v2923
    %v2926 = vor.u32 %v2924, %v2925
    %v2927 = vsub.s32 4294967266, %v2922
    %v2928 = vadd.s32 %v2927, 127
    %v2929 = vshll.u32 %v2928, 23
    %v2930 = vor.u32 4788187, %v2929
    %v2931 = vand.u32 2147483647, %v2930
    %v2933 = vcvt.s32.f32 %v2926
    %v2934 = vmul.f32 %v2933, %v2931
    %v2935 = vxor.u32 %v2934, 2147483648
    %v2936 = vsel %vm2853, %v2935, %v2934
    %v2937 = vsub.s32 4, %v2913
    %v2938 = vsel %vm2853, %v2937, %v2913
    %v2939 = vsel %vm2852, %v2744, %v2936
    %v2940 = vsel %vm2852, 0, %v2938
    %v2941 = vcosq.f32.pop %v2939
    %v2942 = vsinq.f32.pop %v2939
    %vm2943 = vweird.f32 %v2744
    %v2944 = vadd.s32 %v2940, 3
    %v2945 = vand.u32 %v2944, 3
    %vm2946 = vcmp.lt.s32.totalorder %v2945, 2
    %vm2947 = vcmp.eq.s32.totalorder %v2945, 0
    %v2948 = vxor.u32 %v2942, 2147483648
    %v2949 = vsel %vm2947, %v2941, %v2948
    %vm2950 = vcmp.eq.s32.totalorder %v2945, 2
    %v2951 = vxor.u32 %v2941, 2147483648
    %v2952 = vsel %vm2950, %v2951, %v2942
    %v2953 = vsel %vm2946, %v2949, %v2952
    %v2954 = vsel %vm2943, nan, %v2953
    %v2955 = vld [vmem:[%s9] sm:$0x1]
    %v2956 = vmul.f32 %v2850, %v2954
    %v2957 = vld [vmem:[#allocation2] sm:$0x1]
    %2959 = vset.pattern.permute.xlu0 0
    %2960 = vperm.xlu0 %2959, %v2957
    %v2961 = vpop.permute.xlu0 %2960
    %v2963 = vlaneseq
    %v2964 = vshrl.u32 %v2963, 7
    %v2965 = vsub.s32 0, %v2964
    %v2966 = vrot.slane %v2961, %v2965
    %vm2967 = vcmask 64512
    %v2969 = vsel %vm2967, %v2955, 0
    %2971 = vmatprep.subr.mxu0 0.0
    %2972 = vmatpush1.msra.mxu0 %v2956
    %2973 = vmatprep.subr.mxu0 0.0
    %2974 = vmatpush1.msra.mxu0 0.0
    %2975 = vmatprep.subr.mxu0 0.0
    %2976 = vmatpush1.msra.mxu0 0.0
    %2977 = vmatprep.subr.mxu0 0.0
    %2978 = vmatpush1.msra.mxu0 0.0
    %2979 = vmatprep.subr.mxu0 0.0
    %2980 = vmatpush1.msra.mxu0 0.0
    %2981 = vmatprep.subr.mxu0 0.0
    %2982 = vmatpush1.msra.mxu0 0.0
    %2983 = vmatprep.subr.mxu0 0.0
    %2984 = vmatpush1.msra.mxu0 0.0
    %2985 = vmatprep.subr.mxu0 0.0
    %2986 = vmatpush1.msra.mxu0 0.0
    %2987 = vmatprep.subr.mxu0 0.0
    %2988 = vmatpush1.msra.mxu0 0.0
    %2989 = vmatprep.subr.mxu0 0.0
    %2990 = vmatpush1.msra.mxu0 0.0
    %2991 = vmatprep.subr.mxu0 0.0
    %2992 = vmatpush1.msra.mxu0 0.0
    %2993 = vmatprep.subr.mxu0 0.0
    %2994 = vmatpush1.msra.mxu0 0.0
    %2995 = vmatprep.subr.mxu0 0.0
    %2996 = vmatpush1.msra.mxu0 0.0
    %2997 = vmatprep.subr.mxu0 0.0
    %2998 = vmatpush1.msra.mxu0 0.0
    %2999 = vmatprep.subr.mxu0 0.0
    %3000 = vmatpush1.msra.mxu0 0.0
    %3001 = vmatprep.subr.mxu0 0.0
    %3002 = vmatpush1.msra.mxu0 0.0
    %3003 = vmatprep.subr.mxu0 0.0
    %3004 = vmatpush1.msra.mxu0 0.0
    %3005 = vmatprep.subr.mxu0 0.0
    %3006 = vmatpush1.msra.mxu0 0.0
    %3007 = vmatprep.subr.mxu0 0.0
    %3008 = vmatpush1.msra.mxu0 0.0
    %3009 = vmatprep.subr.mxu0 0.0
    %3010 = vmatpush1.msra.mxu0 0.0
    %3011 = vmatprep.subr.mxu0 0.0
    %3012 = vmatpush1.msra.mxu0 0.0
    %3013 = vmatprep.subr.mxu0 0.0
    %3014 = vmatpush1.msra.mxu0 0.0
    %3015 = vmatprep.subr.mxu0 0.0
    %3016 = vmatpush1.msra.mxu0 0.0
    %3017 = vmatprep.subr.mxu0 0.0
    %3018 = vmatpush1.msra.mxu0 0.0
    %3019 = vmatprep.subr.mxu0 0.0
    %3020 = vmatpush1.msra.mxu0 0.0
    %3021 = vmatprep.subr.mxu0 0.0
    %3022 = vmatpush1.msra.mxu0 0.0
    %3023 = vmatprep.subr.mxu0 0.0
    %3024 = vmatpush1.msra.mxu0 0.0
    %3025 = vmatprep.subr.mxu0 0.0
    %3026 = vmatpush1.msra.mxu0 0.0
    %3027 = vmatprep.subr.mxu0 0.0
    %3028 = vmatpush1.msra.mxu0 0.0
    %3029 = vmatprep.subr.mxu0 0.0
    %3030 = vmatpush1.msra.mxu0 0.0
    %3031 = vmatprep.subr.mxu0 0.0
    %3032 = vmatpush1.msra.mxu0 0.0
    %3033 = vmatprep.subr.mxu0 0.0
    %3034 = vmatpush1.msra.mxu0 0.0
    %3035 = vmatprep.mubr.f32.mxu0 0.0
    %3036 = vmatmul.mubr.f32.gmra.mrb[0].mxu0 %v2969
    %v3037 = vpop.f32.mrb[0].mxu0
    %v3038 = vadd.f32 %v2966, %v3037
    %v3039 = vpop.f32.mrb[0].mxu0
    %3040 = vdwg.mxu0
    %v3041 = vtanh.pop %v3038
    %3042 = vst [vmem:[#allocation3] sm:$0x1] %v3041
    // Predicated region
    $region46: #{_head_forward_impl.1} parent=1 // pred_check
      _
    $region47: #{_head_forward_impl.1} parent=1 // pred_check_branch
      %3044 = sbr.rel (0) target = $region49
    $region48: #{_head_forward_impl.1} parent=1 // pred_region
      %s3046 = ssub.s32 16, 16
      %3047 = vsyncadd [#allocation4], %s3046
      %s3049 = sshll.u32 [#allocation3], 4
      %s3050 = int_to_ptr.vmem [resolvable:$true] %s3049
      %3052 = dma.vmem_to_hbm [thread:$0]  %s3050, 16, %s11, [#allocation4]
    $region49: #{_head_forward_impl.1} parent=1 // pred_fallthru
      _
    // Predicated region
    $region50: #{_head_forward_impl.1} parent=1 // pred_check
      _
    $region51: #{_head_forward_impl.1} parent=1 // pred_check_branch
      %3054 = sbr.rel (0) target = $region53
    $region52: #{_head_forward_impl.1} parent=1 // pred_region
      %3055 = dma.done [#allocation4], 16
    $region53: #{_head_forward_impl.1} parent=1 // pred_fallthru
      _
    %3056 = vsyncpa [#allocation4], 1

</llo_original>
